<compile_context>
chip_gen: v7x
topology: tpu7x:2x2x1
jax: 0.10.0
libtpu: 0.0.40
codegen_flags: <defaults>
</compile_context>

<pallas_src>
import functools
import math

import jax
import jax.numpy as jnp
from jax.experimental import pallas as pl
from jax.experimental.pallas import tpu as pltpu


def _round_up(x, m):
    return ((x + m - 1) // m) * m


def _cdiv(a, b):
    return -(-a // b)


def _vmem_limit_bytes():
    # v5e/v6e: 128 MiB VMEM per TensorCore; v7x: 64 MiB.  Use 3/4 of physical,
    # capped at 96 MiB; safe fallback if the query is unavailable.
    try:
        cap = int(pltpu.get_tpu_info().vmem_capacity_bytes)
    except Exception:
        cap = 64 * 1024 * 1024
    return int(max(32 * 1024 * 1024, min(96 * 1024 * 1024, (cap * 3) // 4)))


# --------------------------------------------------------------------------
# Fused kernel: build im2col slab in VMEM -> ONE deep-K MXU dot (f32 acc)
#               -> bias -> activation -> store.
#   x_ref : [Hp_t, Wp_t, CIN_PAD]   full padded image (batch dim squeezed)
#   w_ref : [K_PAD, TCO]            folded weight slab (BN scale folded in)
#   b_ref : [1, TCO]                folded bias (f32)
#   o_ref : [TH*Wo, C_BLK]          output tile (C_BLK == exact Cout if small)
# --------------------------------------------------------------------------
def _conv_block_kernel(x_ref, w_ref, b_ref, o_ref, *,
                       KH, KW, TH, Wo, CIN_PAD, K_PAD, stride, nl, prelu_alpha):
    r = pl.program_id(2)                                   # output-row tile index
    row0 = pl.multiple_of(r * (TH * stride), TH * stride)  # first input row of tile
    m = TH * Wo

    # --- im2col slab [m, K_PAD]: KH*KW shifted taps concatenated along lanes.
    taps = []
    for kh in range(KH):
        for kw in range(KW):
            if stride == 1:
                tap = x_ref[pl.ds(row0 + kh, TH), pl.ds(kw, Wo), :]
            else:
                # TODO(synk): stride>1 strided-ds path is untested.
                tap = x_ref[pl.ds(row0 + kh, TH, stride=stride),
                            pl.ds(kw, Wo, stride=stride), :]
            taps.append(tap)                               # [TH, Wo, CIN_PAD]
    k_raw = KH * KW * CIN_PAD
    slab = jnp.concatenate(taps, axis=-1).reshape(m, k_raw)
    if K_PAD > k_raw:                                      # lane-align K to 128
        slab = jnp.concatenate(
            [slab, jnp.zeros((m, K_PAD - k_raw), slab.dtype)], axis=-1)

    # --- one deep MXU contraction, f32 accumulation inside the MXU.
    y = jnp.dot(slab, w_ref[...], preferred_element_type=jnp.float32)
    y = y + b_ref[...]                                     # per-channel bias (f32)
    if nl == "relu":
        y = jnp.maximum(y, 0.0)
    elif nl == "prelu":
        y = jnp.where(y > 0.0, y, jnp.float32(prelu_alpha) * y)

    c_store = o_ref.shape[-1]            # == exact Cout when Cout < 128 (no HBM pad)
    o_ref[...] = y[:, :c_store].astype(o_ref.dtype)


# --------------------------------------------------------------------------
# ConvBlock forward.  x_nchw: [N, Cin, H, W] (PyTorch layout).
# --------------------------------------------------------------------------
def conv_block_forward(x_nchw, params, *, kernel_size, stride=1, nl="relu",
                       bn=False, compute_dtype=jnp.bfloat16,
                       out_dtype=jnp.float32, m_target=512):
    w = params["conv_w"]                 # [Cout, Cin, KH, KW]
    b = params["conv_b"]                 # [Cout]
    Cout, Cin, KH, KW = w.shape
    pad = (kernel_size - 1) // 2

    N, _, H, W = x_nchw.shape
    Ho = (H + 2 * pad - KH) // stride + 1
    Wo = (W + 2 * pad - KW) // stride + 1

    # ---- contraction / channel padding -------------------------------------
    cin_mult = 16 if jnp.dtype(compute_dtype).itemsize == 2 else 8
    CIN_PAD = _round_up(Cin, cin_mult)
    K_PAD = _round_up(KH * KW * CIN_PAD, 128)          # deep, lane-aligned K

    COUT_MXU = _round_up(Cout, 128)                    # lane-dense MXU N dim
    if Cout >= 128:
        TCO = 256 if COUT_MXU % 256 == 0 else 128
        C_ARR, C_BLK = COUT_MXU, TCO                   # padded HBM out channels
    else:
        # Small Cout: keep HBM output at the true channel count (a 128-lane pad
        # would amplify writeback up to 16x); the MXU still sees 128 columns.
        TCO = COUT_MXU                                 # single channel tile
        C_ARR, C_BLK = Cout, Cout

    # ---- M (output-row) tiling: ~m_target im2col rows, TH*Wo % 8 == 0 -------
    sub_mult = 8 // math.gcd(Wo, 8)
    TH0 = _round_up(max(1, _cdiv(m_target, Wo)), sub_mult)
    nt = _cdiv(Ho, TH0)
    TH = _round_up(_cdiv(Ho, nt), sub_mult)            # rebalance -> minimal waste
    Ho_pad = nt * TH                                   # >= Ho
    m_tile = TH * Wo
    # TODO(synk): add a Wo tile axis for very wide images (Wo > ~1024).

    # ---- activation prep: NCHW -> NHWC, spatial pad (+ extra bottom rows so
    #      in-kernel reads for the padded row tiles never go OOB), cast --------
    Hp, Wp = H + 2 * pad, W + 2 * pad
    extra_h = max(0, (Ho_pad - 1) * stride + KH - Hp)
    extra_w = max(0, (Wo - 1) * stride + KW - Wp)
    x = jnp.transpose(x_nchw, (0, 2, 3, 1))
    x = jnp.pad(x, ((0, 0), (pad, pad + extra_h), (pad, pad + extra_w),
                    (0, CIN_PAD - Cin)))
    x = x.astype(compute_dtype)
    Hp_t, Wp_t = Hp + extra_h, Wp + extra_w

    # ---- fold conv bias + eval-mode BN (eps=1e-3, per module spec) into a
    #      per-channel scale/bias; fold the scale into the weights on the host --
    if bn:
        gamma, beta = params["bn_gamma"], params["bn_beta"]
        mean, var = params["bn_mean"], params["bn_var"]
        eps = 1e-3                                      # nn.BatchNorm2d(..., eps=0.001)
        scale = gamma / jnp.sqrt(var + eps)
        bias = (b - mean) * scale + beta
    else:
        scale = jnp.ones((Cout,), jnp.float32)
        bias = b.astype(jnp.float32)

    # Weight [Cout,Cin,KH,KW] -> im2col slab [K_PAD, COUT_MXU], K order (kh,kw,cin).
    w_t = jnp.transpose(w, (2, 3, 1, 0)).astype(jnp.float32) * scale.reshape(1, 1, 1, Cout)
    w_t = jnp.pad(w_t, ((0, 0), (0, 0), (0, CIN_PAD - Cin), (0, COUT_MXU - Cout)))
    w_t = w_t.reshape(KH * KW * CIN_PAD, COUT_MXU)
    w_t = jnp.pad(w_t, ((0, K_PAD - KH * KW * CIN_PAD), (0, 0))).astype(compute_dtype)
    bias_p = jnp.pad(bias.astype(jnp.float32), (0, COUT_MXU - Cout)).reshape(1, COUT_MXU)
    # NOTE: padded weight columns / bias entries are zero, so any padded output
    # channels are exactly zero (never junk).

    prelu_alpha = float(params.get("prelu_alpha", 0.25))
    kernel = functools.partial(
        _conv_block_kernel, KH=KH, KW=KW, TH=TH, Wo=Wo, CIN_PAD=CIN_PAD,
        K_PAD=K_PAD, stride=stride, nl=nl, prelu_alpha=prelu_alpha)

    cost = pl.CostEstimate(
        flops=int(2 * N * Ho_pad * Wo * K_PAD * COUT_MXU),
        transcendentals=0,
        bytes_accessed=int(x.size * x.dtype.itemsize
                           + w_t.size * w_t.dtype.itemsize
                           + bias_p.size * 4
                           + N * Ho_pad * Wo * C_ARR * jnp.dtype(out_dtype).itemsize))

    # Grid (n, cout_tile, row_tile); row_tile innermost so the resident image and
    # weight blocks are not re-DMA'd across the inner iterations.
    out = pl.pallas_call(
        kernel,
        out_shape=jax.ShapeDtypeStruct((N, Ho_pad * Wo, C_ARR), out_dtype),
        grid_spec=pltpu.PrefetchScalarGridSpec(
            num_scalar_prefetch=0,
            grid=(N, COUT_MXU // TCO, Ho_pad // TH),
            in_specs=[
                # Whole padded image resident per batch element (tiny here).
                pl.BlockSpec((None, Hp_t, Wp_t, CIN_PAD),
                             lambda n, co, r: (n, 0, 0, 0)),
                pl.BlockSpec((K_PAD, TCO), lambda n, co, r: (0, co)),
                pl.BlockSpec((1, TCO), lambda n, co, r: (0, co)),
            ],
            out_specs=pl.BlockSpec((None, m_tile, C_BLK),
                                   lambda n, co, r: (n, r, co)),
        ),
        compiler_params=pltpu.CompilerParams(
            dimension_semantics=("parallel", "parallel", "parallel"),
            vmem_limit_bytes=_vmem_limit_bytes(),
        ),
        cost_estimate=cost,
    )(x, w_t, bias_p)

    # Drop padded rows/channels, NHWC -> NCHW.
    out = out.reshape(N, Ho_pad, Wo, C_ARR)[:, :Ho, :, :Cout]
    # TODO(synk): when stacking ConvBlocks, keep NHWC here and skip the transpose
    #             (and feed the next block NHWC) to avoid an extra HBM round trip.
    return jnp.transpose(out, (0, 3, 1, 2))


# --------------------------------------------------------------------------
# Pure-JAX reference for validation.
# --------------------------------------------------------------------------
def conv_block_reference(x_nchw, params, *, kernel_size, stride=1, nl="relu", bn=False):
    w = params["conv_w"]
    b = params["conv_b"]
    pad = (kernel_size - 1) // 2
    y = jax.lax.conv_general_dilated(
        x_nchw, w, window_strides=(stride, stride),
        padding=[(pad, pad), (pad, pad)],
        dimension_numbers=("NCHW", "OIHW", "NCHW"),
    ) + b.reshape(1, -1, 1, 1)
    if bn:
        gamma = params["bn_gamma"].reshape(1, -1, 1, 1)
        beta = params["bn_beta"].reshape(1, -1, 1, 1)
        mean = params["bn_mean"].reshape(1, -1, 1, 1)
        var = params["bn_var"].reshape(1, -1, 1, 1)
        y = gamma * (y - mean) / jnp.sqrt(var + 1e-3) + beta
    if nl == "relu":
        y = jnp.maximum(y, 0.0)
    elif nl == "prelu":
        a = params.get("prelu_alpha", 0.25)
        y = jnp.where(y > 0.0, y, a * y)
    return y


def make_params(key, in_channels, out_channels, kernel_size):
    k1, k2 = jax.random.split(key)
    return {
        "conv_w": 0.1 * jax.random.normal(
            k1, (out_channels, in_channels, kernel_size, kernel_size), jnp.float32),
        "conv_b": 0.1 * jax.random.normal(k2, (out_channels,), jnp.float32),
        "bn_gamma": jnp.ones((out_channels,), jnp.float32),
        "bn_beta": jnp.zeros((out_channels,), jnp.float32),
        "bn_mean": jnp.zeros((out_channels,), jnp.float32),   # running stats (init)
        "bn_var": jnp.ones((out_channels,), jnp.float32),
        "prelu_alpha": 0.25,                                   # nn.PReLU() default
    }


if __name__ == "__main__":
    key = jax.random.PRNGKey(0)
    kx, kp = jax.random.split(key)

    N, Cin, H, W = 2, 4, 16, 16
    Cout, ksz = 8, 3
    x = jax.random.normal(kx, (N, Cin, H, W), jnp.float32)
    params = make_params(kp, Cin, Cout, ksz)

    r_relu = conv_block_reference(x, params, kernel_size=ksz, nl="relu", bn=False)

    # Case 1: relu, no BN, f32 compute + f32 out (tight structural check).
    y1 = conv_block_forward(x, params, kernel_size=ksz, nl="relu", bn=False,
                            compute_dtype=jnp.float32)
    jax.block_until_ready(y1)
    assert y1.shape == r_relu.shape, "shape mismatch (relu/no-bn)"
    assert jnp.allclose(y1, r_relu, atol=1e-3, rtol=1e-3), "relu/no-bn (f32) mismatch"

    # Case 2: relu, no BN, bf16 compute + bf16 out (fast path, loose tolerance).
    y2 = conv_block_forward(x, params, kernel_size=ksz, nl="relu", bn=False,
                            compute_dtype=jnp.bfloat16, out_dtype=jnp.bfloat16)
    jax.block_until_ready(y2)
    assert y2.dtype == jnp.bfloat16
    assert jnp.allclose(y2.astype(jnp.float32), r_relu, atol=1e-1, rtol=5e-2), \
        "relu/no-bn (bf16) mismatch"

    # Case 3: prelu + eval-mode BN, bf16 compute, f32 out.
    y3 = conv_block_forward(x, params, kernel_size=ksz, nl="prelu", bn=True,
                            compute_dtype=jnp.bfloat16)
    jax.block_until_ready(y3)
    r3 = conv_block_reference(x, params, kernel_size=ksz, nl="prelu", bn=True)
    assert y3.shape == r3.shape, "shape mismatch (prelu/bn)"
    assert jnp.allclose(y3, r3, atol=5e-2, rtol=5e-2), "prelu/bn (bf16) mismatch"

    # Case 4: ragged Ho (row tile does not divide Ho) — exercises the padded
    # tail row-tile path (extra zero input rows + host-side row slice).
    H2, W2 = 41, 16
    x2 = jax.random.normal(jax.random.PRNGKey(1), (N, Cin, H2, W2), jnp.float32)
    y4 = conv_block_forward(x2, params, kernel_size=ksz, nl="relu", bn=False,
                            compute_dtype=jnp.float32)
    jax.block_until_ready(y4)
    r4 = conv_block_reference(x2, params, kernel_size=ksz, nl="relu", bn=False)
    assert y4.shape == r4.shape, "shape mismatch (ragged)"
    assert jnp.allclose(y4, r4, atol=1e-3, rtol=1e-3), "ragged-Ho (f32) mismatch"

    print("KERNEL_OK")
</pallas_src>

<mosaic_0001>
module attributes {stable_mosaic.version = 11 : i64} {
  func.func @_conv_block_kernel(%arg0: i32, %arg1: i32, %arg2: i32, %arg3: memref<1x18x18x8xf32, #tpu.memory_space<vmem>>, %arg4: memref<128x128xf32, #tpu.memory_space<vmem>>, %arg5: memref<1x128xf32, #tpu.memory_space<vmem>>, %arg6: memref<1x256x8xf32, #tpu.memory_space<vmem>>) attributes {dimension_semantics = [#tpu.dimension_semantics<parallel>, #tpu.dimension_semantics<parallel>, #tpu.dimension_semantics<parallel>], iteration_bounds = array<i64: 2, 1, 1>, scalar_prefetch = 0 : i64, scratch_operands = 0 : i64, tpu.core_type = #tpu.core_type<tc>, window_params = [{transform_indices = @transform_0, window_bounds = array<i64: 1, 18, 18, 8>}, {transform_indices = @transform_1, window_bounds = array<i64: 128, 128>}, {transform_indices = @transform_2, window_bounds = array<i64: 1, 128>}, {transform_indices = @transform_3, window_bounds = array<i64: 1, 256, 8>}]} {
    %c16_i32 = arith.constant 16 : i32
    %0 = arith.muli %arg2, %c16_i32 : i32
    %1 = tpu.assume_multiple %0, 16 : i32
    %c0_i32 = arith.constant 0 : i32
    %2 = arith.addi %1, %c0_i32 : i32
    %c0 = arith.constant 0 : index
    %3 = arith.index_cast %2 : i32 to index
    %c0_0 = arith.constant 0 : index
    %c0_1 = arith.constant 0 : index
    %4 = vector.load %arg3[%c0, %3, %c0_0, %c0_1] : memref<1x18x18x8xf32, #tpu.memory_space<vmem>>, vector<1x16x16x8xf32>
    %5 = vector.shape_cast %4 : vector<1x16x16x8xf32> to vector<16x16x8xf32>
    %c0_i32_2 = arith.constant 0 : i32
    %6 = arith.addi %1, %c0_i32_2 : i32
    %c0_3 = arith.constant 0 : index
    %7 = arith.index_cast %6 : i32 to index
    %c1 = arith.constant 1 : index
    %c0_4 = arith.constant 0 : index
    %8 = vector.load %arg3[%c0_3, %7, %c1, %c0_4] : memref<1x18x18x8xf32, #tpu.memory_space<vmem>>, vector<1x16x16x8xf32>
    %9 = vector.shape_cast %8 : vector<1x16x16x8xf32> to vector<16x16x8xf32>
    %c0_i32_5 = arith.constant 0 : i32
    %10 = arith.addi %1, %c0_i32_5 : i32
    %c0_6 = arith.constant 0 : index
    %11 = arith.index_cast %10 : i32 to index
    %c2 = arith.constant 2 : index
    %c0_7 = arith.constant 0 : index
    %12 = vector.load %arg3[%c0_6, %11, %c2, %c0_7] : memref<1x18x18x8xf32, #tpu.memory_space<vmem>>, vector<1x16x16x8xf32>
    %13 = vector.shape_cast %12 : vector<1x16x16x8xf32> to vector<16x16x8xf32>
    %c1_i32 = arith.constant 1 : i32
    %14 = arith.addi %1, %c1_i32 : i32
    %c0_8 = arith.constant 0 : index
    %15 = arith.index_cast %14 : i32 to index
    %c0_9 = arith.constant 0 : index
    %c0_10 = arith.constant 0 : index
    %16 = vector.load %arg3[%c0_8, %15, %c0_9, %c0_10] : memref<1x18x18x8xf32, #tpu.memory_space<vmem>>, vector<1x16x16x8xf32>
    %17 = vector.shape_cast %16 : vector<1x16x16x8xf32> to vector<16x16x8xf32>
    %c1_i32_11 = arith.constant 1 : i32
    %18 = arith.addi %1, %c1_i32_11 : i32
    %c0_12 = arith.constant 0 : index
    %19 = arith.index_cast %18 : i32 to index
    %c1_13 = arith.constant 1 : index
    %c0_14 = arith.constant 0 : index
    %20 = vector.load %arg3[%c0_12, %19, %c1_13, %c0_14] : memref<1x18x18x8xf32, #tpu.memory_space<vmem>>, vector<1x16x16x8xf32>
    %21 = vector.shape_cast %20 : vector<1x16x16x8xf32> to vector<16x16x8xf32>
    %c1_i32_15 = arith.constant 1 : i32
    %22 = arith.addi %1, %c1_i32_15 : i32
    %c0_16 = arith.constant 0 : index
    %23 = arith.index_cast %22 : i32 to index
    %c2_17 = arith.constant 2 : index
    %c0_18 = arith.constant 0 : index
    %24 = vector.load %arg3[%c0_16, %23, %c2_17, %c0_18] : memref<1x18x18x8xf32, #tpu.memory_space<vmem>>, vector<1x16x16x8xf32>
    %25 = vector.shape_cast %24 : vector<1x16x16x8xf32> to vector<16x16x8xf32>
    %c2_i32 = arith.constant 2 : i32
    %26 = arith.addi %1, %c2_i32 : i32
    %c0_19 = arith.constant 0 : index
    %27 = arith.index_cast %26 : i32 to index
    %c0_20 = arith.constant 0 : index
    %c0_21 = arith.constant 0 : index
    %28 = vector.load %arg3[%c0_19, %27, %c0_20, %c0_21] : memref<1x18x18x8xf32, #tpu.memory_space<vmem>>, vector<1x16x16x8xf32>
    %29 = vector.shape_cast %28 : vector<1x16x16x8xf32> to vector<16x16x8xf32>
    %c2_i32_22 = arith.constant 2 : i32
    %30 = arith.addi %1, %c2_i32_22 : i32
    %c0_23 = arith.constant 0 : index
    %31 = arith.index_cast %30 : i32 to index
    %c1_24 = arith.constant 1 : index
    %c0_25 = arith.constant 0 : index
    %32 = vector.load %arg3[%c0_23, %31, %c1_24, %c0_25] : memref<1x18x18x8xf32, #tpu.memory_space<vmem>>, vector<1x16x16x8xf32>
    %33 = vector.shape_cast %32 : vector<1x16x16x8xf32> to vector<16x16x8xf32>
    %c2_i32_26 = arith.constant 2 : i32
    %34 = arith.addi %1, %c2_i32_26 : i32
    %c0_27 = arith.constant 0 : index
    %35 = arith.index_cast %34 : i32 to index
    %c2_28 = arith.constant 2 : index
    %c0_29 = arith.constant 0 : index
    %36 = vector.load %arg3[%c0_27, %35, %c2_28, %c0_29] : memref<1x18x18x8xf32, #tpu.memory_space<vmem>>, vector<1x16x16x8xf32>
    %37 = vector.shape_cast %36 : vector<1x16x16x8xf32> to vector<16x16x8xf32>
    %38 = tpu.concatenate %5, %9, %13, %17, %21, %25, %29, %33, %37 in 2 : vector<16x16x8xf32>, vector<16x16x8xf32>, vector<16x16x8xf32>, vector<16x16x8xf32>, vector<16x16x8xf32>, vector<16x16x8xf32>, vector<16x16x8xf32>, vector<16x16x8xf32>, vector<16x16x8xf32> -> vector<16x16x72xf32>
    %39 = vector.shape_cast %38 : vector<16x16x72xf32> to vector<256x72xf32>
    %cst = arith.constant 0.000000e+00 : f32
    %40 = vector.broadcast %cst : f32 to vector<256x56xf32>
    %41 = tpu.concatenate %39, %40 in 1 : vector<256x72xf32>, vector<256x56xf32> -> vector<256x128xf32>
    %c0_30 = arith.constant 0 : index
    %c0_31 = arith.constant 0 : index
    %42 = vector.load %arg4[%c0_30, %c0_31] : memref<128x128xf32, #tpu.memory_space<vmem>>, vector<128x128xf32>
    %cst_32 = arith.constant dense<0.000000e+00> : vector<256x128xf32>
    %43 = tpu.matmul %41, %42, %cst_32 {dimension_numbers = #tpu.dot_dimension_numbers<[1], [0], [0], [1], [0, 0, 1, 1], [], []>} : vector<256x128xf32>, vector<128x128xf32>, vector<256x128xf32> -> vector<256x128xf32>
    %c0_33 = arith.constant 0 : index
    %c0_34 = arith.constant 0 : index
    %44 = vector.load %arg5[%c0_33, %c0_34] : memref<1x128xf32, #tpu.memory_space<vmem>>, vector<1x128xf32>
    %45 = vector.broadcast %44 : vector<1x128xf32> to vector<256x128xf32>
    %46 = arith.addf %43, %45 : vector<256x128xf32>
    %cst_35 = arith.constant 0.000000e+00 : f32
    %47 = vector.broadcast %cst_35 : f32 to vector<256x128xf32>
    %48 = arith.maximumf %46, %47 : vector<256x128xf32>
    %49 = vector.extract_strided_slice %48 {offsets = [0, 0], sizes = [256, 8], strides = [1, 1]} : vector<256x128xf32> to vector<256x8xf32>
    %c0_36 = arith.constant 0 : index
    %c0_37 = arith.constant 0 : index
    %c0_38 = arith.constant 0 : index
    %50 = vector.load %arg6[%c0_36, %c0_37, %c0_38] : memref<1x256x8xf32, #tpu.memory_space<vmem>>, vector<1x256x8xf32>
    %51 = vector.shape_cast %50 : vector<1x256x8xf32> to vector<256x8xf32>
    %52 = vector.shape_cast %49 : vector<256x8xf32> to vector<1x256x8xf32>
    tpu.vector_store %arg6[%c0_36, %c0_37, %c0_38], %52 {strides = array<i32>} : memref<1x256x8xf32, #tpu.memory_space<vmem>>, vector<1x256x8xf32>,
    return
  }
  func.func @transform_0(%arg0: i32, %arg1: i32, %arg2: i32) -> (i32, i32, i32, i32) {
    %c0_i32 = arith.constant 0 : i32
    %c0_i32_0 = arith.constant 0 : i32
    %c0_i32_1 = arith.constant 0 : i32
    %c0_i32_2 = arith.constant 0 : i32
    return %arg0, %c0_i32, %c0_i32_0, %c0_i32_1 : i32, i32, i32, i32
  }
  func.func @transform_1(%arg0: i32, %arg1: i32, %arg2: i32) -> (i32, i32) {
    %c0_i32 = arith.constant 0 : i32
    %c0_i32_0 = arith.constant 0 : i32
    return %c0_i32, %arg1 : i32, i32
  }
  func.func @transform_2(%arg0: i32, %arg1: i32, %arg2: i32) -> (i32, i32) {
    %c0_i32 = arith.constant 0 : i32
    %c0_i32_0 = arith.constant 0 : i32
    return %c0_i32, %arg1 : i32, i32
  }
  func.func @transform_3(%arg0: i32, %arg1: i32, %arg2: i32) -> (i32, i32, i32) {
    %c0_i32 = arith.constant 0 : i32
    return %arg0, %arg2, %arg1 : i32, i32, i32
  }
}

</mosaic_0001>

<llo_original>
// kernel: tpu_custom_call.1
$region0: #{tpu_custom_call.1}
  #allocation0 [shape = 'u32[]', space=smem, size = 0x4, offset = 0x4, fixed_abs, tag = 'smem constant byte address 0x4 - core index']
  #allocation1 [shape = 'u32[144,128]{1,0:T(1,128)}', space=vmem, size = 0x12000, scoped, tag = 'internal scratch']
  %s0 = inlined_call_operand.vmem [shape: f32[2,18,18,8], index: 0, kind: input, shape index: {}]
  %s1 = inlined_call_operand.vmem [shape: f32[128,128], index: 1, kind: input, shape index: {}]
  %s2 = inlined_call_operand.vmem [shape: f32[1,128], index: 2, kind: input, shape index: {}]
  %s3 = inlined_call_operand.vmem [shape: f32[2,256,8], index: 3, kind: output, shape index: {}]
  %s4 = sld [smem:[#allocation0]]
  $region45: #{tpu_custom_call.1} parent=0
    _
  %s6 = ssub.s32 1, %s4
  %s7 = scalar_select 0, %s6, %s4
  loop: start=0, step=1, limit=4
  $region2: #{tpu_custom_call.1} parent=0 // loop_pre_header
    _
  $region3: #{tpu_custom_call.1} parent=0 // loop_header
    %s9 = sphi 0, %s13
    %p10 = scmp.ge.s32.totalorder %s9, 4
    %s16 = sphi 0, %s35
    %s17 = sphi 0, %s31
    %s18 = sphi 0, %s27
    %s19 = sphi 0, %s16
    %s20 = sphi 0, %s17
    %s21 = sphi 0, %s18
    %s22 = sphi 0, %s19
    %s23 = sphi 0, %s20
    %s24 = sphi 0, %s21
    %s38 = sphi 0, %s40
    %s41 = sphi 0, %s38
    %s42 = sphi 0, %s41
    %s58 = sphi 0, %s42
    %s64 = sphi 0, %s66
    %s67 = sphi 0, %s64
    %s68 = sphi 0, %s67
    %s84 = sphi 0, %s68
    %s90 = sphi 0, %s92
    %s93 = sphi 0, %s90
    %s94 = sphi 0, %s93
    %s110 = sphi 0, %s94
    %s120 = sphi 0, %s122
    %s123 = sphi 0, %s120
    %s124 = sphi 0, %s123
    %s140 = sphi 0, %s124
  $region4: #{tpu_custom_call.1} parent=0 // loop_header_branch
    %12 = sbr.rel (%p10) target = $region8
  $region5: #{tpu_custom_call.1} parent=0 // loop_body
    %s14 = ssub.s32 %s9, 1
    %s15 = ssub.s32 %s9, 2
    %s25 = sadd.s32 1, %s18
    %p26 = scmp.ge.s32.totalorder %s25, 1
    %s27 = scalar_select %p26, 0, %s25
    %s28 = sadd.s32 1, %s17
    %s29 = scalar_select %p26, %s28, %s17
    %p30 = scmp.ge.s32.totalorder %s29, 1
    %s31 = scalar_select %p30, 0, %s29
    %s32 = sadd.s32 1, %s16
    %s33 = scalar_select %p30, %s32, %s16
    %p34 = scmp.ge.s32.totalorder %s33, 2
    %s35 = scalar_select %p34, 0, %s33
    %s36 = ssub.s32 %s16, %s35
    %p37 = scmp.eq.s32.totalorder %s36, 0
    %s39 = sadd.s32 %s38, 1
    %s40 = scalar_select %p37, %s38, %s39
    %p43 = pneg %p37
    %p44 = scmp.eq.s32.totalorder %s9, 1
    %p45 = por %p43, %p44
    %p46 = scmp.ne.s32.totalorder %s38, %s41
    %p47 = scmp.eq.s32.totalorder %s9, 0
    %p48 = por %p46, %p47
    %p49 = scmp.ne.s32.totalorder %s38, %s41
    %p50 = scmp.eq.s32.totalorder %s14, 1
    %p51 = por %p49, %p50
    %p52 = scmp.ne.s32.totalorder %s41, %s42
    %p53 = scmp.eq.s32.totalorder %s14, 0
    %p54 = por %p52, %p53
    %p55 = scmp.ne.s32.totalorder %s41, %s42
    %p56 = scmp.eq.s32.totalorder %s15, 1
    %p57 = por %p55, %p56
    %p59 = scmp.ne.s32.totalorder %s42, %s58
    %p60 = scmp.eq.s32.totalorder %s15, 0
    %p61 = por %p59, %p60
    %s62 = ssub.s32 %s17, %s31
    %p63 = scmp.eq.s32.totalorder %s62, 0
    %s65 = sadd.s32 %s64, 1
    %s66 = scalar_select %p63, %s64, %s65
    %p69 = pneg %p63
    %p70 = scmp.eq.s32.totalorder %s9, 1
    %p71 = por %p69, %p70
    %p72 = scmp.ne.s32.totalorder %s64, %s67
    %p73 = scmp.eq.s32.totalorder %s9, 0
    %p74 = por %p72, %p73
    %p75 = scmp.ne.s32.totalorder %s64, %s67
    %p76 = scmp.eq.s32.totalorder %s14, 1
    %p77 = por %p75, %p76
    %p78 = scmp.ne.s32.totalorder %s67, %s68
    %p79 = scmp.eq.s32.totalorder %s14, 0
    %p80 = por %p78, %p79
    %p81 = scmp.ne.s32.totalorder %s67, %s68
    %p82 = scmp.eq.s32.totalorder %s15, 1
    %p83 = por %p81, %p82
    %p85 = scmp.ne.s32.totalorder %s68, %s84
    %p86 = scmp.eq.s32.totalorder %s15, 0
    %p87 = por %p85, %p86
    %s88 = ssub.s32 %s17, %s31
    %p89 = scmp.eq.s32.totalorder %s88, 0
    %s91 = sadd.s32 %s90, 1
    %s92 = scalar_select %p89, %s90, %s91
    %p95 = pneg %p89
    %p96 = scmp.eq.s32.totalorder %s9, 1
    %p97 = por %p95, %p96
    %p98 = scmp.ne.s32.totalorder %s90, %s93
    %p99 = scmp.eq.s32.totalorder %s9, 0
    %p100 = por %p98, %p99
    %p101 = scmp.ne.s32.totalorder %s90, %s93
    %p102 = scmp.eq.s32.totalorder %s14, 1
    %p103 = por %p101, %p102
    %p104 = scmp.ne.s32.totalorder %s93, %s94
    %p105 = scmp.eq.s32.totalorder %s14, 0
    %p106 = por %p104, %p105
    %p107 = scmp.ne.s32.totalorder %s93, %s94
    %p108 = scmp.eq.s32.totalorder %s15, 1
    %p109 = por %p107, %p108
    %p111 = scmp.ne.s32.totalorder %s94, %s110
    %p112 = scmp.eq.s32.totalorder %s15, 0
    %p113 = por %p111, %p112
    %s114 = ssub.s32 %s16, %s35
    %s115 = ssub.s32 %s18, %s27
    %s116 = sor.u32 %s114, %s115
    %s117 = ssub.s32 %s17, %s31
    %s118 = sor.u32 %s116, %s117
    %p119 = scmp.eq.s32.totalorder %s118, 0
    %s121 = sadd.s32 %s120, 1
    %s122 = scalar_select %p119, %s120, %s121
    %p125 = pneg %p119
    %p126 = scmp.eq.s32.totalorder %s9, 1
    %p127 = por %p125, %p126
    %p128 = scmp.ne.s32.totalorder %s120, %s123
    %p129 = scmp.eq.s32.totalorder %s9, 0
    %p130 = por %p128, %p129
    %p131 = scmp.ne.s32.totalorder %s120, %s123
    %p132 = scmp.eq.s32.totalorder %s14, 1
    %p133 = por %p131, %p132
    %p134 = scmp.ne.s32.totalorder %s123, %s124
    %p135 = scmp.eq.s32.totalorder %s14, 0
    %p136 = por %p134, %p135
    %p137 = scmp.ne.s32.totalorder %s123, %s124
    %p138 = scmp.eq.s32.totalorder %s15, 1
    %p139 = por %p137, %p138
    %p141 = scmp.ne.s32.totalorder %s124, %s140
    %p142 = scmp.eq.s32.totalorder %s15, 0
    %p143 = por %p141, %p142
    %p144 = scmp.le.s32.totalorder 1, %s9
    %p145 = scmp.lt.s32.totalorder %s9, 3
    %p146 = pnand %p144, %p145
    %p147 = pneg %p146
    // Predicated region
    $region9: #{tpu_custom_call.1} parent=5 // pred_check
      _
    $region10: #{tpu_custom_call.1} parent=5 // pred_check_branch
      %149 = sbr.rel (%p146) target = $region12
    $region11: #{tpu_custom_call.1} parent=5 // pred_region
      %s150 = ssub.s32 %s9, 1
      // Predicated region
      $region13: #{tpu_custom_call.1} parent=11 // pred_check
        %p151 = pneg %p80
      $region14: #{tpu_custom_call.1} parent=11 // pred_check_branch
        %153 = sbr.rel (%p151) target = $region16
      $region15: #{tpu_custom_call.1} parent=11 // pred_region
        %p154 = scmp.lt.s32.totalorder %s20, 0
        %s155 = scalar_select %p154, %s20, 0
        %s156 = smul.addr %s155, 8
        %s157 = scalar_lea.vmem %s1, %s156
      $region16: #{tpu_custom_call.1} parent=11 // pred_fallthru
        _
      // Predicated region
      $region17: #{tpu_custom_call.1} parent=11 // pred_check
        %p158 = pneg %p106
      $region18: #{tpu_custom_call.1} parent=11 // pred_check_branch
        %160 = sbr.rel (%p158) target = $region20
      $region19: #{tpu_custom_call.1} parent=11 // pred_region
        %p161 = scmp.lt.s32.totalorder %s20, 0
        %s162 = scalar_select %p161, %s20, 0
        %s163 = scalar_lea.vmem %s2, %s162
      $region20: #{tpu_custom_call.1} parent=11 // pred_fallthru
        _
    $region12: #{tpu_custom_call.1} parent=5 // pred_fallthru
      _
    %p164 = scmp.lt.s32.totalorder %s9, 2
    // Predicated region
    $region21: #{tpu_custom_call.1} parent=5 // pred_check
      %p165 = pneg %p164
    $region22: #{tpu_custom_call.1} parent=5 // pred_check_branch
      %167 = sbr.rel (%p165) target = $region24
    $region23: #{tpu_custom_call.1} parent=5 // pred_region
      // Predicated region
      $region25: #{tpu_custom_call.1} parent=23 // pred_check
        %p168 = pneg %p48
      $region26: #{tpu_custom_call.1} parent=23 // pred_check_branch
        %170 = sbr.rel (%p168) target = $region28
      $region27: #{tpu_custom_call.1} parent=23 // pred_region
        %p171 = scmp.lt.s32.totalorder %s16, 1
        %s172 = scalar_select %p171, %s16, 1
        %s173 = smul.addr %s172, 54
        %s174 = smul.addr %s173, 8
        %s175 = scalar_lea.vmem %s0, %s174
      $region28: #{tpu_custom_call.1} parent=23 // pred_fallthru
        _
    $region24: #{tpu_custom_call.1} parent=5 // pred_fallthru
      _
    %p176 = scmp.le.s32.totalorder 1, %s9
    %p177 = scmp.lt.s32.totalorder %s9, 3
    %p178 = pnand %p176, %p177
    %p179 = pneg %p178
    // Predicated region
    $region29: #{tpu_custom_call.1} parent=5 // pred_check
      _
    $region30: #{tpu_custom_call.1} parent=5 // pred_check_branch
      %181 = sbr.rel (%p178) target = $region32
    $region31: #{tpu_custom_call.1} parent=5 // pred_region
      %s182 = ssub.s32 %s9, 1
      %p183 = scmp.lt.s32.totalorder %s19, 1
      %s184 = scalar_select %p183, %s19, 1
      %s185 = smul.addr %s184, 54
      %s186 = smul.addr %s185, 8
      %s187 = scalar_lea.vmem %s0, %s186
      %p188 = pneg %p54
      %p189 = pneg %p51
      %p190 = scmp.lt.s32.totalorder %s20, 0
      %s191 = scalar_select %p190, %s20, 0
      %s192 = smul.addr %s191, 8
      %s193 = scalar_lea.vmem %s1, %s192
      %p194 = pneg %p80
      %p195 = pneg %p77
      %p196 = scmp.lt.s32.totalorder %s20, 0
      %s197 = scalar_select %p196, %s20, 0
      %s198 = scalar_lea.vmem %s2, %s197
      %p199 = pneg %p106
      %p200 = pneg %p103
      %p201 = pneg %p136
      %p202 = pneg %p133
      %s203 = smul.u32 32, %s21
      %p204 = scmp.lt.s32.totalorder %s19, 1
      %s205 = scalar_select %p204, %s19, 1
      %p206 = scmp.lt.s32.totalorder %s203, 31
      %s207 = scalar_select %p206, %s203, 31
      %p208 = scmp.lt.s32.totalorder %s20, 0
      %s209 = scalar_select %p208, %s20, 0
      %s210 = sadd.s32 %s209, %s207
      %s211 = smul.addr %s205, 32
      %s212 = sadd.s32 %s210, %s211
      %s213 = smul.addr %s212, 8
      %s214 = scalar_lea.vmem %s3, %s213
      %p215 = scmp.lt.s32.totalorder %s19, 1
      %s216 = scalar_select %p215, %s19, 1
      %s217 = smul.addr %s216, 54
      %s218 = smul.addr %s217, 8
      %s219 = scalar_lea.vmem %s0, %s218
      %p220 = scmp.lt.s32.totalorder %s20, 0
      %s221 = scalar_select %p220, %s20, 0
      %s222 = smul.addr %s221, 8
      %s223 = scalar_lea.vmem %s1, %s222
      %p224 = scmp.lt.s32.totalorder %s20, 0
      %s225 = scalar_select %p224, %s20, 0
      %s226 = scalar_lea.vmem %s2, %s225
      %s227 = smul.u32 32, %s21
      %p228 = scmp.lt.s32.totalorder %s19, 1
      %s229 = scalar_select %p228, %s19, 1
      %p230 = scmp.lt.s32.totalorder %s227, 31
      %s231 = scalar_select %p230, %s227, 31
      %p232 = scmp.lt.s32.totalorder %s20, 0
      %s233 = scalar_select %p232, %s20, 0
      %s234 = sadd.s32 %s233, %s231
      %s235 = smul.addr %s229, 32
      %s236 = sadd.s32 %s234, %s235
      %s237 = smul.addr %s236, 8
      %s238 = scalar_lea.vmem %s3, %s237
      %s239 = smul.u32 32, %s21
      %s240 = smul.u32 %s21, 16
      %s241 = smul.u32 %s240, 24
      %s242 = scalar_lea.vmem %s219, %s241
      %v243 = vld [vmem:[%s242] sm:$0xff]
      %v244 = vld [vmem:[%s242 + $0x8] sm:$0xff]
      %v245 = vld [vmem:[%s242 + $0x18] sm:$0xff]
      %v246 = vld [vmem:[%s242 + $0x20] sm:$0xff]
      %v247 = vld [vmem:[%s242 + $0x30] sm:$0xff]
      %v248 = vld [vmem:[%s242 + $0x38] sm:$0xff]
      %v249 = vld [vmem:[%s242 + $0x48] sm:$0xff]
      %v250 = vld [vmem:[%s242 + $0x50] sm:$0xff]
      %v251 = vld [vmem:[%s242 + $0x60] sm:$0xff]
      %v252 = vld [vmem:[%s242 + $0x68] sm:$0xff]
      %v253 = vld [vmem:[%s242 + $0x78] sm:$0xff]
      %v254 = vld [vmem:[%s242 + $0x80] sm:$0xff]
      %v255 = vld [vmem:[%s242 + $0x90] sm:$0xff]
      %v256 = vld [vmem:[%s242 + $0x98] sm:$0xff]
      %v257 = vld [vmem:[%s242 + $0xa8] sm:$0xff]
      %v258 = vld [vmem:[%s242 + $0xb0] sm:$0xff]
      %v259 = vld [vmem:[%s242 + $0xc0] sm:$0xff]
      %v260 = vld [vmem:[%s242 + $0xc8] sm:$0xff]
      %v261 = vld [vmem:[%s242 + $0xd8] sm:$0xff]
      %v262 = vld [vmem:[%s242 + $0xe0] sm:$0xff]
      %v263 = vld [vmem:[%s242 + $0xf0] sm:$0xff]
      %v264 = vld [vmem:[%s242 + $0xf8] sm:$0xff]
      %v265 = vld [vmem:[%s242 + $0x108] sm:$0xff]
      %v266 = vld [vmem:[%s242 + $0x110] sm:$0xff]
      %v267 = vld [vmem:[%s242 + $0x120] sm:$0xff]
      %v268 = vld [vmem:[%s242 + $0x128] sm:$0xff]
      %v269 = vld [vmem:[%s242 + $0x138] sm:$0xff]
      %v270 = vld [vmem:[%s242 + $0x140] sm:$0xff]
      %v271 = vld [vmem:[%s242 + $0x150] sm:$0xff]
      %v272 = vld [vmem:[%s242 + $0x158] sm:$0xff]
      %v273 = vld [vmem:[%s242 + $0x168] sm:$0xff]
      %v274 = vld [vmem:[%s242 + $0x170] sm:$0xff]
      %v275 = vld [vmem:[%s242 + $0x1] sm:$0xff]
      %v276 = vld [vmem:[%s242 + $0x9] sm:$0xff]
      %v277 = vld [vmem:[%s242 + $0x19] sm:$0xff]
      %v278 = vld [vmem:[%s242 + $0x21] sm:$0xff]
      %v279 = vld [vmem:[%s242 + $0x31] sm:$0xff]
      %v280 = vld [vmem:[%s242 + $0x39] sm:$0xff]
      %v281 = vld [vmem:[%s242 + $0x49] sm:$0xff]
      %v282 = vld [vmem:[%s242 + $0x51] sm:$0xff]
      %v283 = vld [vmem:[%s242 + $0x61] sm:$0xff]
      %v284 = vld [vmem:[%s242 + $0x69] sm:$0xff]
      %v285 = vld [vmem:[%s242 + $0x79] sm:$0xff]
      %v286 = vld [vmem:[%s242 + $0x81] sm:$0xff]
      %v287 = vld [vmem:[%s242 + $0x91] sm:$0xff]
      %v288 = vld [vmem:[%s242 + $0x99] sm:$0xff]
      %v289 = vld [vmem:[%s242 + $0xa9] sm:$0xff]
      %v290 = vld [vmem:[%s242 + $0xb1] sm:$0xff]
      %v291 = vld [vmem:[%s242 + $0xc1] sm:$0xff]
      %v292 = vld [vmem:[%s242 + $0xc9] sm:$0xff]
      %v293 = vld [vmem:[%s242 + $0xd9] sm:$0xff]
      %v294 = vld [vmem:[%s242 + $0xe1] sm:$0xff]
      %v295 = vld [vmem:[%s242 + $0xf1] sm:$0xff]
      %v296 = vld [vmem:[%s242 + $0xf9] sm:$0xff]
      %v297 = vld [vmem:[%s242 + $0x109] sm:$0xff]
      %v298 = vld [vmem:[%s242 + $0x111] sm:$0xff]
      %v299 = vld [vmem:[%s242 + $0x121] sm:$0xff]
      %v300 = vld [vmem:[%s242 + $0x129] sm:$0xff]
      %v301 = vld [vmem:[%s242 + $0x139] sm:$0xff]
      %v302 = vld [vmem:[%s242 + $0x141] sm:$0xff]
      %v303 = vld [vmem:[%s242 + $0x151] sm:$0xff]
      %v304 = vld [vmem:[%s242 + $0x159] sm:$0xff]
      %v305 = vld [vmem:[%s242 + $0x169] sm:$0xff]
      %v306 = vld [vmem:[%s242 + $0x171] sm:$0xff]
      %v307 = vld [vmem:[%s242 + $0x2] sm:$0xff]
      %v308 = vld [vmem:[%s242 + $0xa] sm:$0xff]
      %v309 = vld [vmem:[%s242 + $0x1a] sm:$0xff]
      %v310 = vld [vmem:[%s242 + $0x22] sm:$0xff]
      %v311 = vld [vmem:[%s242 + $0x32] sm:$0xff]
      %v312 = vld [vmem:[%s242 + $0x3a] sm:$0xff]
      %v313 = vld [vmem:[%s242 + $0x4a] sm:$0xff]
      %v314 = vld [vmem:[%s242 + $0x52] sm:$0xff]
      %v315 = vld [vmem:[%s242 + $0x62] sm:$0xff]
      %v316 = vld [vmem:[%s242 + $0x6a] sm:$0xff]
      %v317 = vld [vmem:[%s242 + $0x7a] sm:$0xff]
      %v318 = vld [vmem:[%s242 + $0x82] sm:$0xff]
      %v319 = vld [vmem:[%s242 + $0x92] sm:$0xff]
      %v320 = vld [vmem:[%s242 + $0x9a] sm:$0xff]
      %v321 = vld [vmem:[%s242 + $0xaa] sm:$0xff]
      %v322 = vld [vmem:[%s242 + $0xb2] sm:$0xff]
      %v323 = vld [vmem:[%s242 + $0xc2] sm:$0xff]
      %v324 = vld [vmem:[%s242 + $0xca] sm:$0xff]
      %v325 = vld [vmem:[%s242 + $0xda] sm:$0xff]
      %v326 = vld [vmem:[%s242 + $0xe2] sm:$0xff]
      %v327 = vld [vmem:[%s242 + $0xf2] sm:$0xff]
      %v328 = vld [vmem:[%s242 + $0xfa] sm:$0xff]
      %v329 = vld [vmem:[%s242 + $0x10a] sm:$0xff]
      %v330 = vld [vmem:[%s242 + $0x112] sm:$0xff]
      %v331 = vld [vmem:[%s242 + $0x122] sm:$0xff]
      %v332 = vld [vmem:[%s242 + $0x12a] sm:$0xff]
      %v333 = vld [vmem:[%s242 + $0x13a] sm:$0xff]
      %v334 = vld [vmem:[%s242 + $0x142] sm:$0xff]
      %v335 = vld [vmem:[%s242 + $0x152] sm:$0xff]
      %v336 = vld [vmem:[%s242 + $0x15a] sm:$0xff]
      %v337 = vld [vmem:[%s242 + $0x16a] sm:$0xff]
      %v338 = vld [vmem:[%s242 + $0x172] sm:$0xff]
      %s339 = sadd.s32 %s240, 1
      %s340 = smul.u32 %s339, 24
      %s341 = scalar_lea.vmem %s219, %s340
      %v342 = vld [vmem:[%s341] sm:$0xff]
      %v343 = vld [vmem:[%s341 + $0x8] sm:$0xff]
      %v344 = vld [vmem:[%s341 + $0x18] sm:$0xff]
      %v345 = vld [vmem:[%s341 + $0x20] sm:$0xff]
      %v346 = vld [vmem:[%s341 + $0x30] sm:$0xff]
      %v347 = vld [vmem:[%s341 + $0x38] sm:$0xff]
      %v348 = vld [vmem:[%s341 + $0x48] sm:$0xff]
      %v349 = vld [vmem:[%s341 + $0x50] sm:$0xff]
      %v350 = vld [vmem:[%s341 + $0x60] sm:$0xff]
      %v351 = vld [vmem:[%s341 + $0x68] sm:$0xff]
      %v352 = vld [vmem:[%s341 + $0x78] sm:$0xff]
      %v353 = vld [vmem:[%s341 + $0x80] sm:$0xff]
      %v354 = vld [vmem:[%s341 + $0x90] sm:$0xff]
      %v355 = vld [vmem:[%s341 + $0x98] sm:$0xff]
      %v356 = vld [vmem:[%s341 + $0xa8] sm:$0xff]
      %v357 = vld [vmem:[%s341 + $0xb0] sm:$0xff]
      %v358 = vld [vmem:[%s341 + $0xc0] sm:$0xff]
      %v359 = vld [vmem:[%s341 + $0xc8] sm:$0xff]
      %v360 = vld [vmem:[%s341 + $0xd8] sm:$0xff]
      %v361 = vld [vmem:[%s341 + $0xe0] sm:$0xff]
      %v362 = vld [vmem:[%s341 + $0xf0] sm:$0xff]
      %v363 = vld [vmem:[%s341 + $0xf8] sm:$0xff]
      %v364 = vld [vmem:[%s341 + $0x108] sm:$0xff]
      %v365 = vld [vmem:[%s341 + $0x110] sm:$0xff]
      %v366 = vld [vmem:[%s341 + $0x120] sm:$0xff]
      %v367 = vld [vmem:[%s341 + $0x128] sm:$0xff]
      %v368 = vld [vmem:[%s341 + $0x138] sm:$0xff]
      %v369 = vld [vmem:[%s341 + $0x140] sm:$0xff]
      %v370 = vld [vmem:[%s341 + $0x150] sm:$0xff]
      %v371 = vld [vmem:[%s341 + $0x158] sm:$0xff]
      %v372 = vld [vmem:[%s341 + $0x168] sm:$0xff]
      %v373 = vld [vmem:[%s341 + $0x170] sm:$0xff]
      %v374 = vld [vmem:[%s341 + $0x1] sm:$0xff]
      %v375 = vld [vmem:[%s341 + $0x9] sm:$0xff]
      %v376 = vld [vmem:[%s341 + $0x19] sm:$0xff]
      %v377 = vld [vmem:[%s341 + $0x21] sm:$0xff]
      %v378 = vld [vmem:[%s341 + $0x31] sm:$0xff]
      %v379 = vld [vmem:[%s341 + $0x39] sm:$0xff]
      %v380 = vld [vmem:[%s341 + $0x49] sm:$0xff]
      %v381 = vld [vmem:[%s341 + $0x51] sm:$0xff]
      %v382 = vld [vmem:[%s341 + $0x61] sm:$0xff]
      %v383 = vld [vmem:[%s341 + $0x69] sm:$0xff]
      %v384 = vld [vmem:[%s341 + $0x79] sm:$0xff]
      %v385 = vld [vmem:[%s341 + $0x81] sm:$0xff]
      %v386 = vld [vmem:[%s341 + $0x91] sm:$0xff]
      %v387 = vld [vmem:[%s341 + $0x99] sm:$0xff]
      %v388 = vld [vmem:[%s341 + $0xa9] sm:$0xff]
      %v389 = vld [vmem:[%s341 + $0xb1] sm:$0xff]
      %v390 = vld [vmem:[%s341 + $0xc1] sm:$0xff]
      %v391 = vld [vmem:[%s341 + $0xc9] sm:$0xff]
      %v392 = vld [vmem:[%s341 + $0xd9] sm:$0xff]
      %v393 = vld [vmem:[%s341 + $0xe1] sm:$0xff]
      %v394 = vld [vmem:[%s341 + $0xf1] sm:$0xff]
      %v395 = vld [vmem:[%s341 + $0xf9] sm:$0xff]
      %v396 = vld [vmem:[%s341 + $0x109] sm:$0xff]
      %v397 = vld [vmem:[%s341 + $0x111] sm:$0xff]
      %v398 = vld [vmem:[%s341 + $0x121] sm:$0xff]
      %v399 = vld [vmem:[%s341 + $0x129] sm:$0xff]
      %v400 = vld [vmem:[%s341 + $0x139] sm:$0xff]
      %v401 = vld [vmem:[%s341 + $0x141] sm:$0xff]
      %v402 = vld [vmem:[%s341 + $0x151] sm:$0xff]
      %v403 = vld [vmem:[%s341 + $0x159] sm:$0xff]
      %v404 = vld [vmem:[%s341 + $0x169] sm:$0xff]
      %v405 = vld [vmem:[%s341 + $0x171] sm:$0xff]
      %v406 = vld [vmem:[%s341 + $0x2] sm:$0xff]
      %v407 = vld [vmem:[%s341 + $0xa] sm:$0xff]
      %v408 = vld [vmem:[%s341 + $0x1a] sm:$0xff]
      %v409 = vld [vmem:[%s341 + $0x22] sm:$0xff]
      %v410 = vld [vmem:[%s341 + $0x32] sm:$0xff]
      %v411 = vld [vmem:[%s341 + $0x3a] sm:$0xff]
      %v412 = vld [vmem:[%s341 + $0x4a] sm:$0xff]
      %v413 = vld [vmem:[%s341 + $0x52] sm:$0xff]
      %v414 = vld [vmem:[%s341 + $0x62] sm:$0xff]
      %v415 = vld [vmem:[%s341 + $0x6a] sm:$0xff]
      %v416 = vld [vmem:[%s341 + $0x7a] sm:$0xff]
      %v417 = vld [vmem:[%s341 + $0x82] sm:$0xff]
      %v418 = vld [vmem:[%s341 + $0x92] sm:$0xff]
      %v419 = vld [vmem:[%s341 + $0x9a] sm:$0xff]
      %v420 = vld [vmem:[%s341 + $0xaa] sm:$0xff]
      %v421 = vld [vmem:[%s341 + $0xb2] sm:$0xff]
      %v422 = vld [vmem:[%s341 + $0xc2] sm:$0xff]
      %v423 = vld [vmem:[%s341 + $0xca] sm:$0xff]
      %v424 = vld [vmem:[%s341 + $0xda] sm:$0xff]
      %v425 = vld [vmem:[%s341 + $0xe2] sm:$0xff]
      %v426 = vld [vmem:[%s341 + $0xf2] sm:$0xff]
      %v427 = vld [vmem:[%s341 + $0xfa] sm:$0xff]
      %v428 = vld [vmem:[%s341 + $0x10a] sm:$0xff]
      %v429 = vld [vmem:[%s341 + $0x112] sm:$0xff]
      %v430 = vld [vmem:[%s341 + $0x122] sm:$0xff]
      %v431 = vld [vmem:[%s341 + $0x12a] sm:$0xff]
      %v432 = vld [vmem:[%s341 + $0x13a] sm:$0xff]
      %v433 = vld [vmem:[%s341 + $0x142] sm:$0xff]
      %v434 = vld [vmem:[%s341 + $0x152] sm:$0xff]
      %v435 = vld [vmem:[%s341 + $0x15a] sm:$0xff]
      %v436 = vld [vmem:[%s341 + $0x16a] sm:$0xff]
      %v437 = vld [vmem:[%s341 + $0x172] sm:$0xff]
      %s438 = sadd.s32 %s240, 2
      %s439 = smul.u32 %s438, 24
      %s440 = scalar_lea.vmem %s219, %s439
      %v441 = vld [vmem:[%s440] sm:$0xff]
      %v442 = vld [vmem:[%s440 + $0x8] sm:$0xff]
      %v443 = vld [vmem:[%s440 + $0x18] sm:$0xff]
      %v444 = vld [vmem:[%s440 + $0x20] sm:$0xff]
      %v445 = vld [vmem:[%s440 + $0x30] sm:$0xff]
      %v446 = vld [vmem:[%s440 + $0x38] sm:$0xff]
      %v447 = vld [vmem:[%s440 + $0x48] sm:$0xff]
      %v448 = vld [vmem:[%s440 + $0x50] sm:$0xff]
      %v449 = vld [vmem:[%s440 + $0x60] sm:$0xff]
      %v450 = vld [vmem:[%s440 + $0x68] sm:$0xff]
      %v451 = vld [vmem:[%s440 + $0x78] sm:$0xff]
      %v452 = vld [vmem:[%s440 + $0x80] sm:$0xff]
      %v453 = vld [vmem:[%s440 + $0x90] sm:$0xff]
      %v454 = vld [vmem:[%s440 + $0x98] sm:$0xff]
      %v455 = vld [vmem:[%s440 + $0xa8] sm:$0xff]
      %v456 = vld [vmem:[%s440 + $0xb0] sm:$0xff]
      %v457 = vld [vmem:[%s440 + $0xc0] sm:$0xff]
      %v458 = vld [vmem:[%s440 + $0xc8] sm:$0xff]
      %v459 = vld [vmem:[%s440 + $0xd8] sm:$0xff]
      %v460 = vld [vmem:[%s440 + $0xe0] sm:$0xff]
      %v461 = vld [vmem:[%s440 + $0xf0] sm:$0xff]
      %v462 = vld [vmem:[%s440 + $0xf8] sm:$0xff]
      %v463 = vld [vmem:[%s440 + $0x108] sm:$0xff]
      %v464 = vld [vmem:[%s440 + $0x110] sm:$0xff]
      %v465 = vld [vmem:[%s440 + $0x120] sm:$0xff]
      %v466 = vld [vmem:[%s440 + $0x128] sm:$0xff]
      %v467 = vld [vmem:[%s440 + $0x138] sm:$0xff]
      %v468 = vld [vmem:[%s440 + $0x140] sm:$0xff]
      %v469 = vld [vmem:[%s440 + $0x150] sm:$0xff]
      %v470 = vld [vmem:[%s440 + $0x158] sm:$0xff]
      %v471 = vld [vmem:[%s440 + $0x168] sm:$0xff]
      %v472 = vld [vmem:[%s440 + $0x170] sm:$0xff]
      %v473 = vld [vmem:[%s440 + $0x1] sm:$0xff]
      %v474 = vld [vmem:[%s440 + $0x9] sm:$0xff]
      %v475 = vld [vmem:[%s440 + $0x19] sm:$0xff]
      %v476 = vld [vmem:[%s440 + $0x21] sm:$0xff]
      %v477 = vld [vmem:[%s440 + $0x31] sm:$0xff]
      %v478 = vld [vmem:[%s440 + $0x39] sm:$0xff]
      %v479 = vld [vmem:[%s440 + $0x49] sm:$0xff]
      %v480 = vld [vmem:[%s440 + $0x51] sm:$0xff]
      %v481 = vld [vmem:[%s440 + $0x61] sm:$0xff]
      %v482 = vld [vmem:[%s440 + $0x69] sm:$0xff]
      %v483 = vld [vmem:[%s440 + $0x79] sm:$0xff]
      %v484 = vld [vmem:[%s440 + $0x81] sm:$0xff]
      %v485 = vld [vmem:[%s440 + $0x91] sm:$0xff]
      %v486 = vld [vmem:[%s440 + $0x99] sm:$0xff]
      %v487 = vld [vmem:[%s440 + $0xa9] sm:$0xff]
      %v488 = vld [vmem:[%s440 + $0xb1] sm:$0xff]
      %v489 = vld [vmem:[%s440 + $0xc1] sm:$0xff]
      %v490 = vld [vmem:[%s440 + $0xc9] sm:$0xff]
      %v491 = vld [vmem:[%s440 + $0xd9] sm:$0xff]
      %v492 = vld [vmem:[%s440 + $0xe1] sm:$0xff]
      %v493 = vld [vmem:[%s440 + $0xf1] sm:$0xff]
      %v494 = vld [vmem:[%s440 + $0xf9] sm:$0xff]
      %v495 = vld [vmem:[%s440 + $0x109] sm:$0xff]
      %v496 = vld [vmem:[%s440 + $0x111] sm:$0xff]
      %v497 = vld [vmem:[%s440 + $0x121] sm:$0xff]
      %v498 = vld [vmem:[%s440 + $0x129] sm:$0xff]
      %v499 = vld [vmem:[%s440 + $0x139] sm:$0xff]
      %v500 = vld [vmem:[%s440 + $0x141] sm:$0xff]
      %v501 = vld [vmem:[%s440 + $0x151] sm:$0xff]
      %v502 = vld [vmem:[%s440 + $0x159] sm:$0xff]
      %v503 = vld [vmem:[%s440 + $0x169] sm:$0xff]
      %v504 = vld [vmem:[%s440 + $0x171] sm:$0xff]
      %v505 = vld [vmem:[%s440 + $0x2] sm:$0xff]
      %v506 = vld [vmem:[%s440 + $0xa] sm:$0xff]
      %v507 = vld [vmem:[%s440 + $0x1a] sm:$0xff]
      %v508 = vld [vmem:[%s440 + $0x22] sm:$0xff]
      %v509 = vld [vmem:[%s440 + $0x32] sm:$0xff]
      %v510 = vld [vmem:[%s440 + $0x3a] sm:$0xff]
      %v511 = vld [vmem:[%s440 + $0x4a] sm:$0xff]
      %v512 = vld [vmem:[%s440 + $0x52] sm:$0xff]
      %v513 = vld [vmem:[%s440 + $0x62] sm:$0xff]
      %v514 = vld [vmem:[%s440 + $0x6a] sm:$0xff]
      %v515 = vld [vmem:[%s440 + $0x7a] sm:$0xff]
      %v516 = vld [vmem:[%s440 + $0x82] sm:$0xff]
      %v517 = vld [vmem:[%s440 + $0x92] sm:$0xff]
      %v518 = vld [vmem:[%s440 + $0x9a] sm:$0xff]
      %v519 = vld [vmem:[%s440 + $0xaa] sm:$0xff]
      %v520 = vld [vmem:[%s440 + $0xb2] sm:$0xff]
      %v521 = vld [vmem:[%s440 + $0xc2] sm:$0xff]
      %v522 = vld [vmem:[%s440 + $0xca] sm:$0xff]
      %v523 = vld [vmem:[%s440 + $0xda] sm:$0xff]
      %v524 = vld [vmem:[%s440 + $0xe2] sm:$0xff]
      %v525 = vld [vmem:[%s440 + $0xf2] sm:$0xff]
      %v526 = vld [vmem:[%s440 + $0xfa] sm:$0xff]
      %v527 = vld [vmem:[%s440 + $0x10a] sm:$0xff]
      %v528 = vld [vmem:[%s440 + $0x112] sm:$0xff]
      %v529 = vld [vmem:[%s440 + $0x122] sm:$0xff]
      %v530 = vld [vmem:[%s440 + $0x12a] sm:$0xff]
      %v531 = vld [vmem:[%s440 + $0x13a] sm:$0xff]
      %v532 = vld [vmem:[%s440 + $0x142] sm:$0xff]
      %v533 = vld [vmem:[%s440 + $0x152] sm:$0xff]
      %v534 = vld [vmem:[%s440 + $0x15a] sm:$0xff]
      %v535 = vld [vmem:[%s440 + $0x16a] sm:$0xff]
      %v536 = vld [vmem:[%s440 + $0x172] sm:$0xff]
      %569 = vrot.lane.b32.xlu0 %v275, 8
      %v570 = vpop.permute.xlu0 %569
      %571 = vrot.lane.b32.xlu0 %v276, 8
      %v572 = vpop.permute.xlu0 %571
      %573 = vrot.lane.b32.xlu0 %v277, 8
      %v574 = vpop.permute.xlu0 %573
      %575 = vrot.lane.b32.xlu0 %v278, 8
      %v576 = vpop.permute.xlu0 %575
      %577 = vrot.lane.b32.xlu0 %v279, 8
      %v578 = vpop.permute.xlu0 %577
      %579 = vrot.lane.b32.xlu0 %v280, 8
      %v580 = vpop.permute.xlu0 %579
      %581 = vrot.lane.b32.xlu0 %v281, 8
      %v582 = vpop.permute.xlu0 %581
      %583 = vrot.lane.b32.xlu0 %v282, 8
      %v584 = vpop.permute.xlu0 %583
      %585 = vrot.lane.b32.xlu0 %v283, 8
      %v586 = vpop.permute.xlu0 %585
      %587 = vrot.lane.b32.xlu0 %v284, 8
      %v588 = vpop.permute.xlu0 %587
      %589 = vrot.lane.b32.xlu0 %v285, 8
      %v590 = vpop.permute.xlu0 %589
      %591 = vrot.lane.b32.xlu0 %v286, 8
      %v592 = vpop.permute.xlu0 %591
      %593 = vrot.lane.b32.xlu0 %v287, 8
      %v594 = vpop.permute.xlu0 %593
      %595 = vrot.lane.b32.xlu0 %v288, 8
      %v596 = vpop.permute.xlu0 %595
      %597 = vrot.lane.b32.xlu0 %v289, 8
      %v598 = vpop.permute.xlu0 %597
      %599 = vrot.lane.b32.xlu0 %v290, 8
      %v600 = vpop.permute.xlu0 %599
      %601 = vrot.lane.b32.xlu0 %v291, 8
      %v602 = vpop.permute.xlu0 %601
      %603 = vrot.lane.b32.xlu0 %v292, 8
      %v604 = vpop.permute.xlu0 %603
      %605 = vrot.lane.b32.xlu0 %v293, 8
      %v606 = vpop.permute.xlu0 %605
      %607 = vrot.lane.b32.xlu0 %v294, 8
      %v608 = vpop.permute.xlu0 %607
      %609 = vrot.lane.b32.xlu0 %v295, 8
      %v610 = vpop.permute.xlu0 %609
      %611 = vrot.lane.b32.xlu0 %v296, 8
      %v612 = vpop.permute.xlu0 %611
      %613 = vrot.lane.b32.xlu0 %v297, 8
      %v614 = vpop.permute.xlu0 %613
      %615 = vrot.lane.b32.xlu0 %v298, 8
      %v616 = vpop.permute.xlu0 %615
      %617 = vrot.lane.b32.xlu0 %v299, 8
      %v618 = vpop.permute.xlu0 %617
      %619 = vrot.lane.b32.xlu0 %v300, 8
      %v620 = vpop.permute.xlu0 %619
      %621 = vrot.lane.b32.xlu0 %v301, 8
      %v622 = vpop.permute.xlu0 %621
      %623 = vrot.lane.b32.xlu0 %v302, 8
      %v624 = vpop.permute.xlu0 %623
      %625 = vrot.lane.b32.xlu0 %v303, 8
      %v626 = vpop.permute.xlu0 %625
      %627 = vrot.lane.b32.xlu0 %v304, 8
      %v628 = vpop.permute.xlu0 %627
      %629 = vrot.lane.b32.xlu0 %v305, 8
      %v630 = vpop.permute.xlu0 %629
      %631 = vrot.lane.b32.xlu0 %v306, 8
      %v632 = vpop.permute.xlu0 %631
      %697 = vrot.lane.b32.xlu0 %v307, 16
      %v698 = vpop.permute.xlu0 %697
      %699 = vrot.lane.b32.xlu0 %v308, 16
      %v700 = vpop.permute.xlu0 %699
      %701 = vrot.lane.b32.xlu0 %v309, 16
      %v702 = vpop.permute.xlu0 %701
      %703 = vrot.lane.b32.xlu0 %v310, 16
      %v704 = vpop.permute.xlu0 %703
      %705 = vrot.lane.b32.xlu0 %v311, 16
      %v706 = vpop.permute.xlu0 %705
      %707 = vrot.lane.b32.xlu0 %v312, 16
      %v708 = vpop.permute.xlu0 %707
      %709 = vrot.lane.b32.xlu0 %v313, 16
      %v710 = vpop.permute.xlu0 %709
      %711 = vrot.lane.b32.xlu0 %v314, 16
      %v712 = vpop.permute.xlu0 %711
      %713 = vrot.lane.b32.xlu0 %v315, 16
      %v714 = vpop.permute.xlu0 %713
      %715 = vrot.lane.b32.xlu0 %v316, 16
      %v716 = vpop.permute.xlu0 %715
      %717 = vrot.lane.b32.xlu0 %v317, 16
      %v718 = vpop.permute.xlu0 %717
      %719 = vrot.lane.b32.xlu0 %v318, 16
      %v720 = vpop.permute.xlu0 %719
      %721 = vrot.lane.b32.xlu0 %v319, 16
      %v722 = vpop.permute.xlu0 %721
      %723 = vrot.lane.b32.xlu0 %v320, 16
      %v724 = vpop.permute.xlu0 %723
      %725 = vrot.lane.b32.xlu0 %v321, 16
      %v726 = vpop.permute.xlu0 %725
      %727 = vrot.lane.b32.xlu0 %v322, 16
      %v728 = vpop.permute.xlu0 %727
      %729 = vrot.lane.b32.xlu0 %v323, 16
      %v730 = vpop.permute.xlu0 %729
      %731 = vrot.lane.b32.xlu0 %v324, 16
      %v732 = vpop.permute.xlu0 %731
      %733 = vrot.lane.b32.xlu0 %v325, 16
      %v734 = vpop.permute.xlu0 %733
      %735 = vrot.lane.b32.xlu0 %v326, 16
      %v736 = vpop.permute.xlu0 %735
      %737 = vrot.lane.b32.xlu0 %v327, 16
      %v738 = vpop.permute.xlu0 %737
      %739 = vrot.lane.b32.xlu0 %v328, 16
      %v740 = vpop.permute.xlu0 %739
      %741 = vrot.lane.b32.xlu0 %v329, 16
      %v742 = vpop.permute.xlu0 %741
      %743 = vrot.lane.b32.xlu0 %v330, 16
      %v744 = vpop.permute.xlu0 %743
      %745 = vrot.lane.b32.xlu0 %v331, 16
      %v746 = vpop.permute.xlu0 %745
      %747 = vrot.lane.b32.xlu0 %v332, 16
      %v748 = vpop.permute.xlu0 %747
      %749 = vrot.lane.b32.xlu0 %v333, 16
      %v750 = vpop.permute.xlu0 %749
      %751 = vrot.lane.b32.xlu0 %v334, 16
      %v752 = vpop.permute.xlu0 %751
      %753 = vrot.lane.b32.xlu0 %v335, 16
      %v754 = vpop.permute.xlu0 %753
      %755 = vrot.lane.b32.xlu0 %v336, 16
      %v756 = vpop.permute.xlu0 %755
      %757 = vrot.lane.b32.xlu0 %v337, 16
      %v758 = vpop.permute.xlu0 %757
      %759 = vrot.lane.b32.xlu0 %v338, 16
      %v760 = vpop.permute.xlu0 %759
      %825 = vrot.lane.b32.xlu0 %v342, 24
      %v826 = vpop.permute.xlu0 %825
      %827 = vrot.lane.b32.xlu0 %v343, 24
      %v828 = vpop.permute.xlu0 %827
      %829 = vrot.lane.b32.xlu0 %v344, 24
      %v830 = vpop.permute.xlu0 %829
      %831 = vrot.lane.b32.xlu0 %v345, 24
      %v832 = vpop.permute.xlu0 %831
      %833 = vrot.lane.b32.xlu0 %v346, 24
      %v834 = vpop.permute.xlu0 %833
      %835 = vrot.lane.b32.xlu0 %v347, 24
      %v836 = vpop.permute.xlu0 %835
      %837 = vrot.lane.b32.xlu0 %v348, 24
      %v838 = vpop.permute.xlu0 %837
      %839 = vrot.lane.b32.xlu0 %v349, 24
      %v840 = vpop.permute.xlu0 %839
      %841 = vrot.lane.b32.xlu0 %v350, 24
      %v842 = vpop.permute.xlu0 %841
      %843 = vrot.lane.b32.xlu0 %v351, 24
      %v844 = vpop.permute.xlu0 %843
      %845 = vrot.lane.b32.xlu0 %v352, 24
      %v846 = vpop.permute.xlu0 %845
      %847 = vrot.lane.b32.xlu0 %v353, 24
      %v848 = vpop.permute.xlu0 %847
      %849 = vrot.lane.b32.xlu0 %v354, 24
      %v850 = vpop.permute.xlu0 %849
      %851 = vrot.lane.b32.xlu0 %v355, 24
      %v852 = vpop.permute.xlu0 %851
      %853 = vrot.lane.b32.xlu0 %v356, 24
      %v854 = vpop.permute.xlu0 %853
      %855 = vrot.lane.b32.xlu0 %v357, 24
      %v856 = vpop.permute.xlu0 %855
      %857 = vrot.lane.b32.xlu0 %v358, 24
      %v858 = vpop.permute.xlu0 %857
      %859 = vrot.lane.b32.xlu0 %v359, 24
      %v860 = vpop.permute.xlu0 %859
      %861 = vrot.lane.b32.xlu0 %v360, 24
      %v862 = vpop.permute.xlu0 %861
      %863 = vrot.lane.b32.xlu0 %v361, 24
      %v864 = vpop.permute.xlu0 %863
      %865 = vrot.lane.b32.xlu0 %v362, 24
      %v866 = vpop.permute.xlu0 %865
      %867 = vrot.lane.b32.xlu0 %v363, 24
      %v868 = vpop.permute.xlu0 %867
      %869 = vrot.lane.b32.xlu0 %v364, 24
      %v870 = vpop.permute.xlu0 %869
      %871 = vrot.lane.b32.xlu0 %v365, 24
      %v872 = vpop.permute.xlu0 %871
      %873 = vrot.lane.b32.xlu0 %v366, 24
      %v874 = vpop.permute.xlu0 %873
      %875 = vrot.lane.b32.xlu0 %v367, 24
      %v876 = vpop.permute.xlu0 %875
      %877 = vrot.lane.b32.xlu0 %v368, 24
      %v878 = vpop.permute.xlu0 %877
      %879 = vrot.lane.b32.xlu0 %v369, 24
      %v880 = vpop.permute.xlu0 %879
      %881 = vrot.lane.b32.xlu0 %v370, 24
      %v882 = vpop.permute.xlu0 %881
      %883 = vrot.lane.b32.xlu0 %v371, 24
      %v884 = vpop.permute.xlu0 %883
      %885 = vrot.lane.b32.xlu0 %v372, 24
      %v886 = vpop.permute.xlu0 %885
      %887 = vrot.lane.b32.xlu0 %v373, 24
      %v888 = vpop.permute.xlu0 %887
      %953 = vrot.lane.b32.xlu0 %v374, 32
      %v954 = vpop.permute.xlu0 %953
      %955 = vrot.lane.b32.xlu0 %v375, 32
      %v956 = vpop.permute.xlu0 %955
      %957 = vrot.lane.b32.xlu0 %v376, 32
      %v958 = vpop.permute.xlu0 %957
      %959 = vrot.lane.b32.xlu0 %v377, 32
      %v960 = vpop.permute.xlu0 %959
      %961 = vrot.lane.b32.xlu0 %v378, 32
      %v962 = vpop.permute.xlu0 %961
      %963 = vrot.lane.b32.xlu0 %v379, 32
      %v964 = vpop.permute.xlu0 %963
      %965 = vrot.lane.b32.xlu0 %v380, 32
      %v966 = vpop.permute.xlu0 %965
      %967 = vrot.lane.b32.xlu0 %v381, 32
      %v968 = vpop.permute.xlu0 %967
      %969 = vrot.lane.b32.xlu0 %v382, 32
      %v970 = vpop.permute.xlu0 %969
      %971 = vrot.lane.b32.xlu0 %v383, 32
      %v972 = vpop.permute.xlu0 %971
      %973 = vrot.lane.b32.xlu0 %v384, 32
      %v974 = vpop.permute.xlu0 %973
      %975 = vrot.lane.b32.xlu0 %v385, 32
      %v976 = vpop.permute.xlu0 %975
      %977 = vrot.lane.b32.xlu0 %v386, 32
      %v978 = vpop.permute.xlu0 %977
      %979 = vrot.lane.b32.xlu0 %v387, 32
      %v980 = vpop.permute.xlu0 %979
      %981 = vrot.lane.b32.xlu0 %v388, 32
      %v982 = vpop.permute.xlu0 %981
      %983 = vrot.lane.b32.xlu0 %v389, 32
      %v984 = vpop.permute.xlu0 %983
      %985 = vrot.lane.b32.xlu0 %v390, 32
      %v986 = vpop.permute.xlu0 %985
      %987 = vrot.lane.b32.xlu0 %v391, 32
      %v988 = vpop.permute.xlu0 %987
      %989 = vrot.lane.b32.xlu0 %v392, 32
      %v990 = vpop.permute.xlu0 %989
      %991 = vrot.lane.b32.xlu0 %v393, 32
      %v992 = vpop.permute.xlu0 %991
      %993 = vrot.lane.b32.xlu0 %v394, 32
      %v994 = vpop.permute.xlu0 %993
      %995 = vrot.lane.b32.xlu0 %v395, 32
      %v996 = vpop.permute.xlu0 %995
      %997 = vrot.lane.b32.xlu0 %v396, 32
      %v998 = vpop.permute.xlu0 %997
      %999 = vrot.lane.b32.xlu0 %v397, 32
      %v1000 = vpop.permute.xlu0 %999
      %1001 = vrot.lane.b32.xlu0 %v398, 32
      %v1002 = vpop.permute.xlu0 %1001
      %1003 = vrot.lane.b32.xlu0 %v399, 32
      %v1004 = vpop.permute.xlu0 %1003
      %1005 = vrot.lane.b32.xlu0 %v400, 32
      %v1006 = vpop.permute.xlu0 %1005
      %1007 = vrot.lane.b32.xlu0 %v401, 32
      %v1008 = vpop.permute.xlu0 %1007
      %1009 = vrot.lane.b32.xlu0 %v402, 32
      %v1010 = vpop.permute.xlu0 %1009
      %1011 = vrot.lane.b32.xlu0 %v403, 32
      %v1012 = vpop.permute.xlu0 %1011
      %1013 = vrot.lane.b32.xlu0 %v404, 32
      %v1014 = vpop.permute.xlu0 %1013
      %1015 = vrot.lane.b32.xlu0 %v405, 32
      %v1016 = vpop.permute.xlu0 %1015
      %1081 = vrot.lane.b32.xlu0 %v406, 40
      %v1082 = vpop.permute.xlu0 %1081
      %1083 = vrot.lane.b32.xlu0 %v407, 40
      %v1084 = vpop.permute.xlu0 %1083
      %1085 = vrot.lane.b32.xlu0 %v408, 40
      %v1086 = vpop.permute.xlu0 %1085
      %1087 = vrot.lane.b32.xlu0 %v409, 40
      %v1088 = vpop.permute.xlu0 %1087
      %1089 = vrot.lane.b32.xlu0 %v410, 40
      %v1090 = vpop.permute.xlu0 %1089
      %1091 = vrot.lane.b32.xlu0 %v411, 40
      %v1092 = vpop.permute.xlu0 %1091
      %1093 = vrot.lane.b32.xlu0 %v412, 40
      %v1094 = vpop.permute.xlu0 %1093
      %1095 = vrot.lane.b32.xlu0 %v413, 40
      %v1096 = vpop.permute.xlu0 %1095
      %1097 = vrot.lane.b32.xlu0 %v414, 40
      %v1098 = vpop.permute.xlu0 %1097
      %1099 = vrot.lane.b32.xlu0 %v415, 40
      %v1100 = vpop.permute.xlu0 %1099
      %1101 = vrot.lane.b32.xlu0 %v416, 40
      %v1102 = vpop.permute.xlu0 %1101
      %1103 = vrot.lane.b32.xlu0 %v417, 40
      %v1104 = vpop.permute.xlu0 %1103
      %1105 = vrot.lane.b32.xlu0 %v418, 40
      %v1106 = vpop.permute.xlu0 %1105
      %1107 = vrot.lane.b32.xlu0 %v419, 40
      %v1108 = vpop.permute.xlu0 %1107
      %1109 = vrot.lane.b32.xlu0 %v420, 40
      %v1110 = vpop.permute.xlu0 %1109
      %1111 = vrot.lane.b32.xlu0 %v421, 40
      %v1112 = vpop.permute.xlu0 %1111
      %1113 = vrot.lane.b32.xlu0 %v422, 40
      %v1114 = vpop.permute.xlu0 %1113
      %1115 = vrot.lane.b32.xlu0 %v423, 40
      %v1116 = vpop.permute.xlu0 %1115
      %1117 = vrot.lane.b32.xlu0 %v424, 40
      %v1118 = vpop.permute.xlu0 %1117
      %1119 = vrot.lane.b32.xlu0 %v425, 40
      %v1120 = vpop.permute.xlu0 %1119
      %1121 = vrot.lane.b32.xlu0 %v426, 40
      %v1122 = vpop.permute.xlu0 %1121
      %1123 = vrot.lane.b32.xlu0 %v427, 40
      %v1124 = vpop.permute.xlu0 %1123
      %1125 = vrot.lane.b32.xlu0 %v428, 40
      %v1126 = vpop.permute.xlu0 %1125
      %1127 = vrot.lane.b32.xlu0 %v429, 40
      %v1128 = vpop.permute.xlu0 %1127
      %1129 = vrot.lane.b32.xlu0 %v430, 40
      %v1130 = vpop.permute.xlu0 %1129
      %1131 = vrot.lane.b32.xlu0 %v431, 40
      %v1132 = vpop.permute.xlu0 %1131
      %1133 = vrot.lane.b32.xlu0 %v432, 40
      %v1134 = vpop.permute.xlu0 %1133
      %1135 = vrot.lane.b32.xlu0 %v433, 40
      %v1136 = vpop.permute.xlu0 %1135
      %1137 = vrot.lane.b32.xlu0 %v434, 40
      %v1138 = vpop.permute.xlu0 %1137
      %1139 = vrot.lane.b32.xlu0 %v435, 40
      %v1140 = vpop.permute.xlu0 %1139
      %1141 = vrot.lane.b32.xlu0 %v436, 40
      %v1142 = vpop.permute.xlu0 %1141
      %1143 = vrot.lane.b32.xlu0 %v437, 40
      %v1144 = vpop.permute.xlu0 %1143
      %1209 = vrot.lane.b32.xlu0 %v441, 48
      %v1210 = vpop.permute.xlu0 %1209
      %1211 = vrot.lane.b32.xlu0 %v442, 48
      %v1212 = vpop.permute.xlu0 %1211
      %1213 = vrot.lane.b32.xlu0 %v443, 48
      %v1214 = vpop.permute.xlu0 %1213
      %1215 = vrot.lane.b32.xlu0 %v444, 48
      %v1216 = vpop.permute.xlu0 %1215
      %1217 = vrot.lane.b32.xlu0 %v445, 48
      %v1218 = vpop.permute.xlu0 %1217
      %1219 = vrot.lane.b32.xlu0 %v446, 48
      %v1220 = vpop.permute.xlu0 %1219
      %1221 = vrot.lane.b32.xlu0 %v447, 48
      %v1222 = vpop.permute.xlu0 %1221
      %1223 = vrot.lane.b32.xlu0 %v448, 48
      %v1224 = vpop.permute.xlu0 %1223
      %1225 = vrot.lane.b32.xlu0 %v449, 48
      %v1226 = vpop.permute.xlu0 %1225
      %1227 = vrot.lane.b32.xlu0 %v450, 48
      %v1228 = vpop.permute.xlu0 %1227
      %1229 = vrot.lane.b32.xlu0 %v451, 48
      %v1230 = vpop.permute.xlu0 %1229
      %1231 = vrot.lane.b32.xlu0 %v452, 48
      %v1232 = vpop.permute.xlu0 %1231
      %1233 = vrot.lane.b32.xlu0 %v453, 48
      %v1234 = vpop.permute.xlu0 %1233
      %1235 = vrot.lane.b32.xlu0 %v454, 48
      %v1236 = vpop.permute.xlu0 %1235
      %1237 = vrot.lane.b32.xlu0 %v455, 48
      %v1238 = vpop.permute.xlu0 %1237
      %1239 = vrot.lane.b32.xlu0 %v456, 48
      %v1240 = vpop.permute.xlu0 %1239
      %1241 = vrot.lane.b32.xlu0 %v457, 48
      %v1242 = vpop.permute.xlu0 %1241
      %1243 = vrot.lane.b32.xlu0 %v458, 48
      %v1244 = vpop.permute.xlu0 %1243
      %1245 = vrot.lane.b32.xlu0 %v459, 48
      %v1246 = vpop.permute.xlu0 %1245
      %1247 = vrot.lane.b32.xlu0 %v460, 48
      %v1248 = vpop.permute.xlu0 %1247
      %1249 = vrot.lane.b32.xlu0 %v461, 48
      %v1250 = vpop.permute.xlu0 %1249
      %1251 = vrot.lane.b32.xlu0 %v462, 48
      %v1252 = vpop.permute.xlu0 %1251
      %1253 = vrot.lane.b32.xlu0 %v463, 48
      %v1254 = vpop.permute.xlu0 %1253
      %1255 = vrot.lane.b32.xlu0 %v464, 48
      %v1256 = vpop.permute.xlu0 %1255
      %1257 = vrot.lane.b32.xlu0 %v465, 48
      %v1258 = vpop.permute.xlu0 %1257
      %1259 = vrot.lane.b32.xlu0 %v466, 48
      %v1260 = vpop.permute.xlu0 %1259
      %1261 = vrot.lane.b32.xlu0 %v467, 48
      %v1262 = vpop.permute.xlu0 %1261
      %1263 = vrot.lane.b32.xlu0 %v468, 48
      %v1264 = vpop.permute.xlu0 %1263
      %1265 = vrot.lane.b32.xlu0 %v469, 48
      %v1266 = vpop.permute.xlu0 %1265
      %1267 = vrot.lane.b32.xlu0 %v470, 48
      %v1268 = vpop.permute.xlu0 %1267
      %1269 = vrot.lane.b32.xlu0 %v471, 48
      %v1270 = vpop.permute.xlu0 %1269
      %1271 = vrot.lane.b32.xlu0 %v472, 48
      %v1272 = vpop.permute.xlu0 %1271
      %1337 = vrot.lane.b32.xlu0 %v473, 56
      %v1338 = vpop.permute.xlu0 %1337
      %1339 = vrot.lane.b32.xlu0 %v474, 56
      %v1340 = vpop.permute.xlu0 %1339
      %1341 = vrot.lane.b32.xlu0 %v475, 56
      %v1342 = vpop.permute.xlu0 %1341
      %1343 = vrot.lane.b32.xlu0 %v476, 56
      %v1344 = vpop.permute.xlu0 %1343
      %1345 = vrot.lane.b32.xlu0 %v477, 56
      %v1346 = vpop.permute.xlu0 %1345
      %1347 = vrot.lane.b32.xlu0 %v478, 56
      %v1348 = vpop.permute.xlu0 %1347
      %1349 = vrot.lane.b32.xlu0 %v479, 56
      %v1350 = vpop.permute.xlu0 %1349
      %1351 = vrot.lane.b32.xlu0 %v480, 56
      %v1352 = vpop.permute.xlu0 %1351
      %1353 = vrot.lane.b32.xlu0 %v481, 56
      %v1354 = vpop.permute.xlu0 %1353
      %1355 = vrot.lane.b32.xlu0 %v482, 56
      %v1356 = vpop.permute.xlu0 %1355
      %1357 = vrot.lane.b32.xlu0 %v483, 56
      %v1358 = vpop.permute.xlu0 %1357
      %1359 = vrot.lane.b32.xlu0 %v484, 56
      %v1360 = vpop.permute.xlu0 %1359
      %1361 = vrot.lane.b32.xlu0 %v485, 56
      %v1362 = vpop.permute.xlu0 %1361
      %1363 = vrot.lane.b32.xlu0 %v486, 56
      %v1364 = vpop.permute.xlu0 %1363
      %1365 = vrot.lane.b32.xlu0 %v487, 56
      %v1366 = vpop.permute.xlu0 %1365
      %1367 = vrot.lane.b32.xlu0 %v488, 56
      %v1368 = vpop.permute.xlu0 %1367
      %1369 = vrot.lane.b32.xlu0 %v489, 56
      %v1370 = vpop.permute.xlu0 %1369
      %1371 = vrot.lane.b32.xlu0 %v490, 56
      %v1372 = vpop.permute.xlu0 %1371
      %1373 = vrot.lane.b32.xlu0 %v491, 56
      %v1374 = vpop.permute.xlu0 %1373
      %1375 = vrot.lane.b32.xlu0 %v492, 56
      %v1376 = vpop.permute.xlu0 %1375
      %1377 = vrot.lane.b32.xlu0 %v493, 56
      %v1378 = vpop.permute.xlu0 %1377
      %1379 = vrot.lane.b32.xlu0 %v494, 56
      %v1380 = vpop.permute.xlu0 %1379
      %1381 = vrot.lane.b32.xlu0 %v495, 56
      %v1382 = vpop.permute.xlu0 %1381
      %1383 = vrot.lane.b32.xlu0 %v496, 56
      %v1384 = vpop.permute.xlu0 %1383
      %1385 = vrot.lane.b32.xlu0 %v497, 56
      %v1386 = vpop.permute.xlu0 %1385
      %1387 = vrot.lane.b32.xlu0 %v498, 56
      %v1388 = vpop.permute.xlu0 %1387
      %1389 = vrot.lane.b32.xlu0 %v499, 56
      %v1390 = vpop.permute.xlu0 %1389
      %1391 = vrot.lane.b32.xlu0 %v500, 56
      %v1392 = vpop.permute.xlu0 %1391
      %1393 = vrot.lane.b32.xlu0 %v501, 56
      %v1394 = vpop.permute.xlu0 %1393
      %1395 = vrot.lane.b32.xlu0 %v502, 56
      %v1396 = vpop.permute.xlu0 %1395
      %1397 = vrot.lane.b32.xlu0 %v503, 56
      %v1398 = vpop.permute.xlu0 %1397
      %1399 = vrot.lane.b32.xlu0 %v504, 56
      %v1400 = vpop.permute.xlu0 %1399
      %1465 = vrot.lane.b32.xlu0 %v505, 64
      %v1466 = vpop.permute.xlu0 %1465
      %1467 = vrot.lane.b32.xlu0 %v506, 64
      %v1468 = vpop.permute.xlu0 %1467
      %1469 = vrot.lane.b32.xlu0 %v507, 64
      %v1470 = vpop.permute.xlu0 %1469
      %1471 = vrot.lane.b32.xlu0 %v508, 64
      %v1472 = vpop.permute.xlu0 %1471
      %1473 = vrot.lane.b32.xlu0 %v509, 64
      %v1474 = vpop.permute.xlu0 %1473
      %1475 = vrot.lane.b32.xlu0 %v510, 64
      %v1476 = vpop.permute.xlu0 %1475
      %1477 = vrot.lane.b32.xlu0 %v511, 64
      %v1478 = vpop.permute.xlu0 %1477
      %1479 = vrot.lane.b32.xlu0 %v512, 64
      %v1480 = vpop.permute.xlu0 %1479
      %1481 = vrot.lane.b32.xlu0 %v513, 64
      %v1482 = vpop.permute.xlu0 %1481
      %1483 = vrot.lane.b32.xlu0 %v514, 64
      %v1484 = vpop.permute.xlu0 %1483
      %1485 = vrot.lane.b32.xlu0 %v515, 64
      %v1486 = vpop.permute.xlu0 %1485
      %1487 = vrot.lane.b32.xlu0 %v516, 64
      %v1488 = vpop.permute.xlu0 %1487
      %1489 = vrot.lane.b32.xlu0 %v517, 64
      %v1490 = vpop.permute.xlu0 %1489
      %1491 = vrot.lane.b32.xlu0 %v518, 64
      %v1492 = vpop.permute.xlu0 %1491
      %1493 = vrot.lane.b32.xlu0 %v519, 64
      %v1494 = vpop.permute.xlu0 %1493
      %1495 = vrot.lane.b32.xlu0 %v520, 64
      %v1496 = vpop.permute.xlu0 %1495
      %1497 = vrot.lane.b32.xlu0 %v521, 64
      %v1498 = vpop.permute.xlu0 %1497
      %1499 = vrot.lane.b32.xlu0 %v522, 64
      %v1500 = vpop.permute.xlu0 %1499
      %1501 = vrot.lane.b32.xlu0 %v523, 64
      %v1502 = vpop.permute.xlu0 %1501
      %1503 = vrot.lane.b32.xlu0 %v524, 64
      %v1504 = vpop.permute.xlu0 %1503
      %1505 = vrot.lane.b32.xlu0 %v525, 64
      %v1506 = vpop.permute.xlu0 %1505
      %1507 = vrot.lane.b32.xlu0 %v526, 64
      %v1508 = vpop.permute.xlu0 %1507
      %1509 = vrot.lane.b32.xlu0 %v527, 64
      %v1510 = vpop.permute.xlu0 %1509
      %1511 = vrot.lane.b32.xlu0 %v528, 64
      %v1512 = vpop.permute.xlu0 %1511
      %1513 = vrot.lane.b32.xlu0 %v529, 64
      %v1514 = vpop.permute.xlu0 %1513
      %1515 = vrot.lane.b32.xlu0 %v530, 64
      %v1516 = vpop.permute.xlu0 %1515
      %1517 = vrot.lane.b32.xlu0 %v531, 64
      %v1518 = vpop.permute.xlu0 %1517
      %1519 = vrot.lane.b32.xlu0 %v532, 64
      %v1520 = vpop.permute.xlu0 %1519
      %1521 = vrot.lane.b32.xlu0 %v533, 64
      %v1522 = vpop.permute.xlu0 %1521
      %1523 = vrot.lane.b32.xlu0 %v534, 64
      %v1524 = vpop.permute.xlu0 %1523
      %1525 = vrot.lane.b32.xlu0 %v535, 64
      %v1526 = vpop.permute.xlu0 %1525
      %1527 = vrot.lane.b32.xlu0 %v536, 64
      %v1528 = vpop.permute.xlu0 %1527
      %vm1561 = vcmask 64512
      %v1562 = vsel %vm1561, %v243, %v570
      %v1563 = vsel %vm1561, %v244, %v572
      %v1564 = vsel %vm1561, %v245, %v574
      %v1565 = vsel %vm1561, %v246, %v576
      %v1566 = vsel %vm1561, %v247, %v578
      %v1567 = vsel %vm1561, %v248, %v580
      %v1568 = vsel %vm1561, %v249, %v582
      %v1569 = vsel %vm1561, %v250, %v584
      %v1570 = vsel %vm1561, %v251, %v586
      %v1571 = vsel %vm1561, %v252, %v588
      %v1572 = vsel %vm1561, %v253, %v590
      %v1573 = vsel %vm1561, %v254, %v592
      %v1574 = vsel %vm1561, %v255, %v594
      %v1575 = vsel %vm1561, %v256, %v596
      %v1576 = vsel %vm1561, %v257, %v598
      %v1577 = vsel %vm1561, %v258, %v600
      %v1578 = vsel %vm1561, %v259, %v602
      %v1579 = vsel %vm1561, %v260, %v604
      %v1580 = vsel %vm1561, %v261, %v606
      %v1581 = vsel %vm1561, %v262, %v608
      %v1582 = vsel %vm1561, %v263, %v610
      %v1583 = vsel %vm1561, %v264, %v612
      %v1584 = vsel %vm1561, %v265, %v614
      %v1585 = vsel %vm1561, %v266, %v616
      %v1586 = vsel %vm1561, %v267, %v618
      %v1587 = vsel %vm1561, %v268, %v620
      %v1588 = vsel %vm1561, %v269, %v622
      %v1589 = vsel %vm1561, %v270, %v624
      %v1590 = vsel %vm1561, %v271, %v626
      %v1591 = vsel %vm1561, %v272, %v628
      %v1592 = vsel %vm1561, %v273, %v630
      %v1593 = vsel %vm1561, %v274, %v632
      %vm1594 = vcmask 130048
      %v1595 = vsel %vm1594, %v1562, %v698
      %v1596 = vsel %vm1594, %v1563, %v700
      %v1597 = vsel %vm1594, %v1564, %v702
      %v1598 = vsel %vm1594, %v1565, %v704
      %v1599 = vsel %vm1594, %v1566, %v706
      %v1600 = vsel %vm1594, %v1567, %v708
      %v1601 = vsel %vm1594, %v1568, %v710
      %v1602 = vsel %vm1594, %v1569, %v712
      %v1603 = vsel %vm1594, %v1570, %v714
      %v1604 = vsel %vm1594, %v1571, %v716
      %v1605 = vsel %vm1594, %v1572, %v718
      %v1606 = vsel %vm1594, %v1573, %v720
      %v1607 = vsel %vm1594, %v1574, %v722
      %v1608 = vsel %vm1594, %v1575, %v724
      %v1609 = vsel %vm1594, %v1576, %v726
      %v1610 = vsel %vm1594, %v1577, %v728
      %v1611 = vsel %vm1594, %v1578, %v730
      %v1612 = vsel %vm1594, %v1579, %v732
      %v1613 = vsel %vm1594, %v1580, %v734
      %v1614 = vsel %vm1594, %v1581, %v736
      %v1615 = vsel %vm1594, %v1582, %v738
      %v1616 = vsel %vm1594, %v1583, %v740
      %v1617 = vsel %vm1594, %v1584, %v742
      %v1618 = vsel %vm1594, %v1585, %v744
      %v1619 = vsel %vm1594, %v1586, %v746
      %v1620 = vsel %vm1594, %v1587, %v748
      %v1621 = vsel %vm1594, %v1588, %v750
      %v1622 = vsel %vm1594, %v1589, %v752
      %v1623 = vsel %vm1594, %v1590, %v754
      %v1624 = vsel %vm1594, %v1591, %v756
      %v1625 = vsel %vm1594, %v1592, %v758
      %v1626 = vsel %vm1594, %v1593, %v760
      %vm1627 = vcmask 195584
      %v1628 = vsel %vm1627, %v1595, %v826
      %v1629 = vsel %vm1627, %v1596, %v828
      %v1630 = vsel %vm1627, %v1597, %v830
      %v1631 = vsel %vm1627, %v1598, %v832
      %v1632 = vsel %vm1627, %v1599, %v834
      %v1633 = vsel %vm1627, %v1600, %v836
      %v1634 = vsel %vm1627, %v1601, %v838
      %v1635 = vsel %vm1627, %v1602, %v840
      %v1636 = vsel %vm1627, %v1603, %v842
      %v1637 = vsel %vm1627, %v1604, %v844
      %v1638 = vsel %vm1627, %v1605, %v846
      %v1639 = vsel %vm1627, %v1606, %v848
      %v1640 = vsel %vm1627, %v1607, %v850
      %v1641 = vsel %vm1627, %v1608, %v852
      %v1642 = vsel %vm1627, %v1609, %v854
      %v1643 = vsel %vm1627, %v1610, %v856
      %v1644 = vsel %vm1627, %v1611, %v858
      %v1645 = vsel %vm1627, %v1612, %v860
      %v1646 = vsel %vm1627, %v1613, %v862
      %v1647 = vsel %vm1627, %v1614, %v864
      %v1648 = vsel %vm1627, %v1615, %v866
      %v1649 = vsel %vm1627, %v1616, %v868
      %v1650 = vsel %vm1627, %v1617, %v870
      %v1651 = vsel %vm1627, %v1618, %v872
      %v1652 = vsel %vm1627, %v1619, %v874
      %v1653 = vsel %vm1627, %v1620, %v876
      %v1654 = vsel %vm1627, %v1621, %v878
      %v1655 = vsel %vm1627, %v1622, %v880
      %v1656 = vsel %vm1627, %v1623, %v882
      %v1657 = vsel %vm1627, %v1624, %v884
      %v1658 = vsel %vm1627, %v1625, %v886
      %v1659 = vsel %vm1627, %v1626, %v888
      %vm1660 = vcmask 261120
      %v1661 = vsel %vm1660, %v1628, %v954
      %v1662 = vsel %vm1660, %v1629, %v956
      %v1663 = vsel %vm1660, %v1630, %v958
      %v1664 = vsel %vm1660, %v1631, %v960
      %v1665 = vsel %vm1660, %v1632, %v962
      %v1666 = vsel %vm1660, %v1633, %v964
      %v1667 = vsel %vm1660, %v1634, %v966
      %v1668 = vsel %vm1660, %v1635, %v968
      %v1669 = vsel %vm1660, %v1636, %v970
      %v1670 = vsel %vm1660, %v1637, %v972
      %v1671 = vsel %vm1660, %v1638, %v974
      %v1672 = vsel %vm1660, %v1639, %v976
      %v1673 = vsel %vm1660, %v1640, %v978
      %v1674 = vsel %vm1660, %v1641, %v980
      %v1675 = vsel %vm1660, %v1642, %v982
      %v1676 = vsel %vm1660, %v1643, %v984
      %v1677 = vsel %vm1660, %v1644, %v986
      %v1678 = vsel %vm1660, %v1645, %v988
      %v1679 = vsel %vm1660, %v1646, %v990
      %v1680 = vsel %vm1660, %v1647, %v992
      %v1681 = vsel %vm1660, %v1648, %v994
      %v1682 = vsel %vm1660, %v1649, %v996
      %v1683 = vsel %vm1660, %v1650, %v998
      %v1684 = vsel %vm1660, %v1651, %v1000
      %v1685 = vsel %vm1660, %v1652, %v1002
      %v1686 = vsel %vm1660, %v1653, %v1004
      %v1687 = vsel %vm1660, %v1654, %v1006
      %v1688 = vsel %vm1660, %v1655, %v1008
      %v1689 = vsel %vm1660, %v1656, %v1010
      %v1690 = vsel %vm1660, %v1657, %v1012
      %v1691 = vsel %vm1660, %v1658, %v1014
      %v1692 = vsel %vm1660, %v1659, %v1016
      %vm1693 = vcmask 326656
      %v1694 = vsel %vm1693, %v1661, %v1082
      %v1695 = vsel %vm1693, %v1662, %v1084
      %v1696 = vsel %vm1693, %v1663, %v1086
      %v1697 = vsel %vm1693, %v1664, %v1088
      %v1698 = vsel %vm1693, %v1665, %v1090
      %v1699 = vsel %vm1693, %v1666, %v1092
      %v1700 = vsel %vm1693, %v1667, %v1094
      %v1701 = vsel %vm1693, %v1668, %v1096
      %v1702 = vsel %vm1693, %v1669, %v1098
      %v1703 = vsel %vm1693, %v1670, %v1100
      %v1704 = vsel %vm1693, %v1671, %v1102
      %v1705 = vsel %vm1693, %v1672, %v1104
      %v1706 = vsel %vm1693, %v1673, %v1106
      %v1707 = vsel %vm1693, %v1674, %v1108
      %v1708 = vsel %vm1693, %v1675, %v1110
      %v1709 = vsel %vm1693, %v1676, %v1112
      %v1710 = vsel %vm1693, %v1677, %v1114
      %v1711 = vsel %vm1693, %v1678, %v1116
      %v1712 = vsel %vm1693, %v1679, %v1118
      %v1713 = vsel %vm1693, %v1680, %v1120
      %v1714 = vsel %vm1693, %v1681, %v1122
      %v1715 = vsel %vm1693, %v1682, %v1124
      %v1716 = vsel %vm1693, %v1683, %v1126
      %v1717 = vsel %vm1693, %v1684, %v1128
      %v1718 = vsel %vm1693, %v1685, %v1130
      %v1719 = vsel %vm1693, %v1686, %v1132
      %v1720 = vsel %vm1693, %v1687, %v1134
      %v1721 = vsel %vm1693, %v1688, %v1136
      %v1722 = vsel %vm1693, %v1689, %v1138
      %v1723 = vsel %vm1693, %v1690, %v1140
      %v1724 = vsel %vm1693, %v1691, %v1142
      %v1725 = vsel %vm1693, %v1692, %v1144
      %vm1726 = vcmask 392192
      %v1727 = vsel %vm1726, %v1694, %v1210
      %v1728 = vsel %vm1726, %v1695, %v1212
      %v1729 = vsel %vm1726, %v1696, %v1214
      %v1730 = vsel %vm1726, %v1697, %v1216
      %v1731 = vsel %vm1726, %v1698, %v1218
      %v1732 = vsel %vm1726, %v1699, %v1220
      %v1733 = vsel %vm1726, %v1700, %v1222
      %v1734 = vsel %vm1726, %v1701, %v1224
      %v1735 = vsel %vm1726, %v1702, %v1226
      %v1736 = vsel %vm1726, %v1703, %v1228
      %v1737 = vsel %vm1726, %v1704, %v1230
      %v1738 = vsel %vm1726, %v1705, %v1232
      %v1739 = vsel %vm1726, %v1706, %v1234
      %v1740 = vsel %vm1726, %v1707, %v1236
      %v1741 = vsel %vm1726, %v1708, %v1238
      %v1742 = vsel %vm1726, %v1709, %v1240
      %v1743 = vsel %vm1726, %v1710, %v1242
      %v1744 = vsel %vm1726, %v1711, %v1244
      %v1745 = vsel %vm1726, %v1712, %v1246
      %v1746 = vsel %vm1726, %v1713, %v1248
      %v1747 = vsel %vm1726, %v1714, %v1250
      %v1748 = vsel %vm1726, %v1715, %v1252
      %v1749 = vsel %vm1726, %v1716, %v1254
      %v1750 = vsel %vm1726, %v1717, %v1256
      %v1751 = vsel %vm1726, %v1718, %v1258
      %v1752 = vsel %vm1726, %v1719, %v1260
      %v1753 = vsel %vm1726, %v1720, %v1262
      %v1754 = vsel %vm1726, %v1721, %v1264
      %v1755 = vsel %vm1726, %v1722, %v1266
      %v1756 = vsel %vm1726, %v1723, %v1268
      %v1757 = vsel %vm1726, %v1724, %v1270
      %v1758 = vsel %vm1726, %v1725, %v1272
      %vm1759 = vcmask 457728
      %v1760 = vsel %vm1759, %v1727, %v1338
      %v1761 = vsel %vm1759, %v1728, %v1340
      %v1762 = vsel %vm1759, %v1729, %v1342
      %v1763 = vsel %vm1759, %v1730, %v1344
      %v1764 = vsel %vm1759, %v1731, %v1346
      %v1765 = vsel %vm1759, %v1732, %v1348
      %v1766 = vsel %vm1759, %v1733, %v1350
      %v1767 = vsel %vm1759, %v1734, %v1352
      %v1768 = vsel %vm1759, %v1735, %v1354
      %v1769 = vsel %vm1759, %v1736, %v1356
      %v1770 = vsel %vm1759, %v1737, %v1358
      %v1771 = vsel %vm1759, %v1738, %v1360
      %v1772 = vsel %vm1759, %v1739, %v1362
      %v1773 = vsel %vm1759, %v1740, %v1364
      %v1774 = vsel %vm1759, %v1741, %v1366
      %v1775 = vsel %vm1759, %v1742, %v1368
      %v1776 = vsel %vm1759, %v1743, %v1370
      %v1777 = vsel %vm1759, %v1744, %v1372
      %v1778 = vsel %vm1759, %v1745, %v1374
      %v1779 = vsel %vm1759, %v1746, %v1376
      %v1780 = vsel %vm1759, %v1747, %v1378
      %v1781 = vsel %vm1759, %v1748, %v1380
      %v1782 = vsel %vm1759, %v1749, %v1382
      %v1783 = vsel %vm1759, %v1750, %v1384
      %v1784 = vsel %vm1759, %v1751, %v1386
      %v1785 = vsel %vm1759, %v1752, %v1388
      %v1786 = vsel %vm1759, %v1753, %v1390
      %v1787 = vsel %vm1759, %v1754, %v1392
      %v1788 = vsel %vm1759, %v1755, %v1394
      %v1789 = vsel %vm1759, %v1756, %v1396
      %v1790 = vsel %vm1759, %v1757, %v1398
      %v1791 = vsel %vm1759, %v1758, %v1400
      %vm1792 = vcmask 523264
      %v1793 = vsel %vm1792, %v1760, %v1466
      %v1794 = vsel %vm1792, %v1761, %v1468
      %v1795 = vsel %vm1792, %v1762, %v1470
      %v1796 = vsel %vm1792, %v1763, %v1472
      %v1797 = vsel %vm1792, %v1764, %v1474
      %v1798 = vsel %vm1792, %v1765, %v1476
      %v1799 = vsel %vm1792, %v1766, %v1478
      %v1800 = vsel %vm1792, %v1767, %v1480
      %v1801 = vsel %vm1792, %v1768, %v1482
      %v1802 = vsel %vm1792, %v1769, %v1484
      %v1803 = vsel %vm1792, %v1770, %v1486
      %v1804 = vsel %vm1792, %v1771, %v1488
      %v1805 = vsel %vm1792, %v1772, %v1490
      %v1806 = vsel %vm1792, %v1773, %v1492
      %v1807 = vsel %vm1792, %v1774, %v1494
      %v1808 = vsel %vm1792, %v1775, %v1496
      %v1809 = vsel %vm1792, %v1776, %v1498
      %v1810 = vsel %vm1792, %v1777, %v1500
      %v1811 = vsel %vm1792, %v1778, %v1502
      %v1812 = vsel %vm1792, %v1779, %v1504
      %v1813 = vsel %vm1792, %v1780, %v1506
      %v1814 = vsel %vm1792, %v1781, %v1508
      %v1815 = vsel %vm1792, %v1782, %v1510
      %v1816 = vsel %vm1792, %v1783, %v1512
      %v1817 = vsel %vm1792, %v1784, %v1514
      %v1818 = vsel %vm1792, %v1785, %v1516
      %v1819 = vsel %vm1792, %v1786, %v1518
      %v1820 = vsel %vm1792, %v1787, %v1520
      %v1821 = vsel %vm1792, %v1788, %v1522
      %v1822 = vsel %vm1792, %v1789, %v1524
      %v1823 = vsel %vm1792, %v1790, %v1526
      %v1824 = vsel %vm1792, %v1791, %v1528
      %vm1825 = vcmask 588800
      %v1826 = vsel %vm1825, %v1793, 0.0
      %v1827 = vsel %vm1825, %v1794, 0.0
      %v1828 = vsel %vm1825, %v1795, 0.0
      %v1829 = vsel %vm1825, %v1796, 0.0
      %v1830 = vsel %vm1825, %v1797, 0.0
      %v1831 = vsel %vm1825, %v1798, 0.0
      %v1832 = vsel %vm1825, %v1799, 0.0
      %v1833 = vsel %vm1825, %v1800, 0.0
      %v1834 = vsel %vm1825, %v1801, 0.0
      %v1835 = vsel %vm1825, %v1802, 0.0
      %v1836 = vsel %vm1825, %v1803, 0.0
      %v1837 = vsel %vm1825, %v1804, 0.0
      %v1838 = vsel %vm1825, %v1805, 0.0
      %v1839 = vsel %vm1825, %v1806, 0.0
      %v1840 = vsel %vm1825, %v1807, 0.0
      %v1841 = vsel %vm1825, %v1808, 0.0
      %v1842 = vsel %vm1825, %v1809, 0.0
      %v1843 = vsel %vm1825, %v1810, 0.0
      %v1844 = vsel %vm1825, %v1811, 0.0
      %v1845 = vsel %vm1825, %v1812, 0.0
      %v1846 = vsel %vm1825, %v1813, 0.0
      %v1847 = vsel %vm1825, %v1814, 0.0
      %v1848 = vsel %vm1825, %v1815, 0.0
      %v1849 = vsel %vm1825, %v1816, 0.0
      %v1850 = vsel %vm1825, %v1817, 0.0
      %v1851 = vsel %vm1825, %v1818, 0.0
      %v1852 = vsel %vm1825, %v1819, 0.0
      %v1853 = vsel %vm1825, %v1820, 0.0
      %v1854 = vsel %vm1825, %v1821, 0.0
      %v1855 = vsel %vm1825, %v1822, 0.0
      %v1856 = vsel %vm1825, %v1823, 0.0
      %v1857 = vsel %vm1825, %v1824, 0.0
      %v1858 = vld [vmem:[%s223] sm:$0xff]
      %v1859 = vld [vmem:[%s223 + $0x8] sm:$0xff]
      %v1860 = vld [vmem:[%s223 + $0x10] sm:$0xff]
      %v1861 = vld [vmem:[%s223 + $0x18] sm:$0xff]
      %v1862 = vld [vmem:[%s223 + $0x20] sm:$0xff]
      %v1863 = vld [vmem:[%s223 + $0x28] sm:$0xff]
      %v1864 = vld [vmem:[%s223 + $0x30] sm:$0xff]
      %v1865 = vld [vmem:[%s223 + $0x38] sm:$0xff]
      %v1866 = vld [vmem:[%s223 + $0x40] sm:$0xff]
      %v1867 = vld [vmem:[%s223 + $0x48] sm:$0xff]
      %v1868 = vld [vmem:[%s223 + $0x50] sm:$0xff]
      %v1869 = vld [vmem:[%s223 + $0x58] sm:$0xff]
      %v1870 = vld [vmem:[%s223 + $0x60] sm:$0xff]
      %v1871 = vld [vmem:[%s223 + $0x68] sm:$0xff]
      %v1872 = vld [vmem:[%s223 + $0x70] sm:$0xff]
      %v1873 = vld [vmem:[%s223 + $0x78] sm:$0xff]
      %v1874 = vld [vmem:[%s226] sm:$0x1]
      %v1876 = vlaneseq
      %v1877 = vshrl.u32 %v1876, 7
      %v1878 = vsub.s32 0, %v1877
      %v1879 = vrot.slane %v1874, %v1878
      %1881 = vmatprep.subr.mxu0 0.0
      %1882 = vmatpush1.msra.mxu0 %v1858
      %1883 = vmatprep.subr.mxu0 0.0
      %1884 = vmatpush1.msra.mxu0 %v1859
      %1885 = vmatprep.subr.mxu0 0.0
      %1886 = vmatpush1.msra.mxu0 %v1860
      %1887 = vmatprep.subr.mxu0 0.0
      %1888 = vmatpush1.msra.mxu0 %v1861
      %1889 = vmatprep.subr.mxu0 0.0
      %1890 = vmatpush1.msra.mxu0 %v1862
      %1891 = vmatprep.subr.mxu0 0.0
      %1892 = vmatpush1.msra.mxu0 %v1863
      %1893 = vmatprep.subr.mxu0 0.0
      %1894 = vmatpush1.msra.mxu0 %v1864
      %1895 = vmatprep.subr.mxu0 0.0
      %1896 = vmatpush1.msra.mxu0 %v1865
      %1897 = vmatprep.subr.mxu0 0.0
      %1898 = vmatpush1.msra.mxu0 %v1866
      %1899 = vmatprep.subr.mxu0 0.0
      %1900 = vmatpush1.msra.mxu0 %v1867
      %1901 = vmatprep.subr.mxu0 0.0
      %1902 = vmatpush1.msra.mxu0 %v1868
      %1903 = vmatprep.subr.mxu0 0.0
      %1904 = vmatpush1.msra.mxu0 %v1869
      %1905 = vmatprep.subr.mxu0 0.0
      %1906 = vmatpush1.msra.mxu0 %v1870
      %1907 = vmatprep.subr.mxu0 0.0
      %1908 = vmatpush1.msra.mxu0 %v1871
      %1909 = vmatprep.subr.mxu0 0.0
      %1910 = vmatpush1.msra.mxu0 %v1872
      %1911 = vmatprep.subr.mxu0 0.0
      %1912 = vmatpush1.msra.mxu0 %v1873
      %1913 = vmatprep.subr.mxu0 0.0
      %1914 = vmatpush1.msra.mxu0 0.0
      %1915 = vmatprep.subr.mxu0 0.0
      %1916 = vmatpush1.msra.mxu0 0.0
      %1917 = vmatprep.subr.mxu0 0.0
      %1918 = vmatpush1.msra.mxu0 0.0
      %1919 = vmatprep.subr.mxu0 0.0
      %1920 = vmatpush1.msra.mxu0 0.0
      %1921 = vmatprep.subr.mxu0 0.0
      %1922 = vmatpush1.msra.mxu0 0.0
      %1923 = vmatprep.subr.mxu0 0.0
      %1924 = vmatpush1.msra.mxu0 0.0
      %1925 = vmatprep.subr.mxu0 0.0
      %1926 = vmatpush1.msra.mxu0 0.0
      %1927 = vmatprep.subr.mxu0 0.0
      %1928 = vmatpush1.msra.mxu0 0.0
      %1929 = vmatprep.subr.mxu0 0.0
      %1930 = vmatpush1.msra.mxu0 0.0
      %1931 = vmatprep.subr.mxu0 0.0
      %1932 = vmatpush1.msra.mxu0 0.0
      %1933 = vmatprep.subr.mxu0 0.0
      %1934 = vmatpush1.msra.mxu0 0.0
      %1935 = vmatprep.subr.mxu0 0.0
      %1936 = vmatpush1.msra.mxu0 0.0
      %1937 = vmatprep.subr.mxu0 0.0
      %1938 = vmatpush1.msra.mxu0 0.0
      %1939 = vmatprep.subr.mxu0 0.0
      %1940 = vmatpush1.msra.mxu0 0.0
      %1941 = vmatprep.subr.mxu0 0.0
      %1942 = vmatpush1.msra.mxu0 0.0
      %1943 = vmatprep.subr.mxu0 0.0
      %1944 = vmatpush1.msra.mxu0 0.0
      %1945 = vmatprep.mubr.f32.mxu0 0.0
      %1946 = vmatmul.mubr.f32.gmra.mrb[0].mxu0 %v1826
      %v1947 = vpop.f32.mrb[0].mxu0
      %v1948 = vadd.f32 %v1879, %v1947
      %v1949 = vpop.f32.mrb[0].mxu0
      %1950 = vmatprep.mubr.f32.mxu0 0.0
      %1951 = vmatmul.mubr.f32.gmra.mrb[0].mxu0 %v1827
      %v1952 = vpop.f32.mrb[0].mxu0
      %v1953 = vadd.f32 %v1879, %v1952
      %v1954 = vpop.f32.mrb[0].mxu0
      %1955 = vmatprep.mubr.f32.mxu0 0.0
      %1956 = vmatmul.mubr.f32.gmra.mrb[0].mxu0 %v1828
      %v1957 = vpop.f32.mrb[0].mxu0
      %v1958 = vadd.f32 %v1879, %v1957
      %v1959 = vpop.f32.mrb[0].mxu0
      %1960 = vmatprep.mubr.f32.mxu0 0.0
      %1961 = vmatmul.mubr.f32.gmra.mrb[0].mxu0 %v1829
      %v1962 = vpop.f32.mrb[0].mxu0
      %v1963 = vadd.f32 %v1879, %v1962
      %v1964 = vpop.f32.mrb[0].mxu0
      %1965 = vmatprep.mubr.f32.mxu0 0.0
      %1966 = vmatmul.mubr.f32.gmra.mrb[0].mxu0 %v1830
      %v1967 = vpop.f32.mrb[0].mxu0
      %v1968 = vadd.f32 %v1879, %v1967
      %v1969 = vpop.f32.mrb[0].mxu0
      %1970 = vmatprep.mubr.f32.mxu0 0.0
      %1971 = vmatmul.mubr.f32.gmra.mrb[0].mxu0 %v1831
      %v1972 = vpop.f32.mrb[0].mxu0
      %v1973 = vadd.f32 %v1879, %v1972
      %v1974 = vpop.f32.mrb[0].mxu0
      %1975 = vmatprep.mubr.f32.mxu0 0.0
      %1976 = vmatmul.mubr.f32.gmra.mrb[0].mxu0 %v1832
      %v1977 = vpop.f32.mrb[0].mxu0
      %v1978 = vadd.f32 %v1879, %v1977
      %v1979 = vpop.f32.mrb[0].mxu0
      %1980 = vmatprep.mubr.f32.mxu0 0.0
      %1981 = vmatmul.mubr.f32.gmra.mrb[0].mxu0 %v1833
      %v1982 = vpop.f32.mrb[0].mxu0
      %v1983 = vadd.f32 %v1879, %v1982
      %v1984 = vpop.f32.mrb[0].mxu0
      %1985 = vmatprep.mubr.f32.mxu0 0.0
      %1986 = vmatmul.mubr.f32.gmra.mrb[0].mxu0 %v1834
      %v1987 = vpop.f32.mrb[0].mxu0
      %v1988 = vadd.f32 %v1879, %v1987
      %v1989 = vpop.f32.mrb[0].mxu0
      %1990 = vmatprep.mubr.f32.mxu0 0.0
      %1991 = vmatmul.mubr.f32.gmra.mrb[0].mxu0 %v1835
      %v1992 = vpop.f32.mrb[0].mxu0
      %v1993 = vadd.f32 %v1879, %v1992
      %v1994 = vpop.f32.mrb[0].mxu0
      %1995 = vmatprep.mubr.f32.mxu0 0.0
      %1996 = vmatmul.mubr.f32.gmra.mrb[0].mxu0 %v1836
      %v1997 = vpop.f32.mrb[0].mxu0
      %v1998 = vadd.f32 %v1879, %v1997
      %v1999 = vpop.f32.mrb[0].mxu0
      %2000 = vmatprep.mubr.f32.mxu0 0.0
      %2001 = vmatmul.mubr.f32.gmra.mrb[0].mxu0 %v1837
      %v2002 = vpop.f32.mrb[0].mxu0
      %v2003 = vadd.f32 %v1879, %v2002
      %v2004 = vpop.f32.mrb[0].mxu0
      %2005 = vmatprep.mubr.f32.mxu0 0.0
      %2006 = vmatmul.mubr.f32.gmra.mrb[0].mxu0 %v1838
      %v2007 = vpop.f32.mrb[0].mxu0
      %v2008 = vadd.f32 %v1879, %v2007
      %v2009 = vpop.f32.mrb[0].mxu0
      %2010 = vmatprep.mubr.f32.mxu0 0.0
      %2011 = vmatmul.mubr.f32.gmra.mrb[0].mxu0 %v1839
      %v2012 = vpop.f32.mrb[0].mxu0
      %v2013 = vadd.f32 %v1879, %v2012
      %v2014 = vpop.f32.mrb[0].mxu0
      %2015 = vmatprep.mubr.f32.mxu0 0.0
      %2016 = vmatmul.mubr.f32.gmra.mrb[0].mxu0 %v1840
      %v2017 = vpop.f32.mrb[0].mxu0
      %v2018 = vadd.f32 %v1879, %v2017
      %v2019 = vpop.f32.mrb[0].mxu0
      %2020 = vmatprep.mubr.f32.mxu0 0.0
      %2021 = vmatmul.mubr.f32.gmra.mrb[0].mxu0 %v1841
      %v2022 = vpop.f32.mrb[0].mxu0
      %v2023 = vadd.f32 %v1879, %v2022
      %v2024 = vpop.f32.mrb[0].mxu0
      %2025 = vmatprep.mubr.f32.mxu0 0.0
      %2026 = vmatmul.mubr.f32.gmra.mrb[0].mxu0 %v1842
      %v2027 = vpop.f32.mrb[0].mxu0
      %v2028 = vadd.f32 %v1879, %v2027
      %v2029 = vpop.f32.mrb[0].mxu0
      %2030 = vmatprep.mubr.f32.mxu0 0.0
      %2031 = vmatmul.mubr.f32.gmra.mrb[0].mxu0 %v1843
      %v2032 = vpop.f32.mrb[0].mxu0
      %v2033 = vadd.f32 %v1879, %v2032
      %v2034 = vpop.f32.mrb[0].mxu0
      %2035 = vmatprep.mubr.f32.mxu0 0.0
      %2036 = vmatmul.mubr.f32.gmra.mrb[0].mxu0 %v1844
      %v2037 = vpop.f32.mrb[0].mxu0
      %v2038 = vadd.f32 %v1879, %v2037
      %v2039 = vpop.f32.mrb[0].mxu0
      %2040 = vmatprep.mubr.f32.mxu0 0.0
      %2041 = vmatmul.mubr.f32.gmra.mrb[0].mxu0 %v1845
      %v2042 = vpop.f32.mrb[0].mxu0
      %v2043 = vadd.f32 %v1879, %v2042
      %v2044 = vpop.f32.mrb[0].mxu0
      %2045 = vmatprep.mubr.f32.mxu0 0.0
      %2046 = vmatmul.mubr.f32.gmra.mrb[0].mxu0 %v1846
      %v2047 = vpop.f32.mrb[0].mxu0
      %v2048 = vadd.f32 %v1879, %v2047
      %v2049 = vpop.f32.mrb[0].mxu0
      %2050 = vmatprep.mubr.f32.mxu0 0.0
      %2051 = vmatmul.mubr.f32.gmra.mrb[0].mxu0 %v1847
      %v2052 = vpop.f32.mrb[0].mxu0
      %v2053 = vadd.f32 %v1879, %v2052
      %v2054 = vpop.f32.mrb[0].mxu0
      %2055 = vmatprep.mubr.f32.mxu0 0.0
      %2056 = vmatmul.mubr.f32.gmra.mrb[0].mxu0 %v1848
      %v2057 = vpop.f32.mrb[0].mxu0
      %v2058 = vadd.f32 %v1879, %v2057
      %v2059 = vpop.f32.mrb[0].mxu0
      %2060 = vmatprep.mubr.f32.mxu0 0.0
      %2061 = vmatmul.mubr.f32.gmra.mrb[0].mxu0 %v1849
      %v2062 = vpop.f32.mrb[0].mxu0
      %v2063 = vadd.f32 %v1879, %v2062
      %v2064 = vpop.f32.mrb[0].mxu0
      %2065 = vmatprep.mubr.f32.mxu0 0.0
      %2066 = vmatmul.mubr.f32.gmra.mrb[0].mxu0 %v1850
      %v2067 = vpop.f32.mrb[0].mxu0
      %v2068 = vadd.f32 %v1879, %v2067
      %v2069 = vpop.f32.mrb[0].mxu0
      %2070 = vmatprep.mubr.f32.mxu0 0.0
      %2071 = vmatmul.mubr.f32.gmra.mrb[0].mxu0 %v1851
      %v2072 = vpop.f32.mrb[0].mxu0
      %v2073 = vadd.f32 %v1879, %v2072
      %v2074 = vpop.f32.mrb[0].mxu0
      %2075 = vmatprep.mubr.f32.mxu0 0.0
      %2076 = vmatmul.mubr.f32.gmra.mrb[0].mxu0 %v1852
      %v2077 = vpop.f32.mrb[0].mxu0
      %v2078 = vadd.f32 %v1879, %v2077
      %v2079 = vpop.f32.mrb[0].mxu0
      %2080 = vmatprep.mubr.f32.mxu0 0.0
      %2081 = vmatmul.mubr.f32.gmra.mrb[0].mxu0 %v1853
      %v2082 = vpop.f32.mrb[0].mxu0
      %v2083 = vadd.f32 %v1879, %v2082
      %v2084 = vpop.f32.mrb[0].mxu0
      %2085 = vmatprep.mubr.f32.mxu0 0.0
      %2086 = vmatmul.mubr.f32.gmra.mrb[0].mxu0 %v1854
      %v2087 = vpop.f32.mrb[0].mxu0
      %v2088 = vadd.f32 %v1879, %v2087
      %v2089 = vpop.f32.mrb[0].mxu0
      %2090 = vmatprep.mubr.f32.mxu0 0.0
      %2091 = vmatmul.mubr.f32.gmra.mrb[0].mxu0 %v1855
      %v2092 = vpop.f32.mrb[0].mxu0
      %v2093 = vadd.f32 %v1879, %v2092
      %v2094 = vpop.f32.mrb[0].mxu0
      %2095 = vmatprep.mubr.f32.mxu0 0.0
      %2096 = vmatmul.mubr.f32.gmra.mrb[0].mxu0 %v1856
      %v2097 = vpop.f32.mrb[0].mxu0
      %v2098 = vadd.f32 %v1879, %v2097
      %v2099 = vpop.f32.mrb[0].mxu0
      %2100 = vmatprep.mubr.f32.mxu0 0.0
      %2101 = vmatmul.mubr.f32.gmra.mrb[0].mxu0 %v1857
      %v2102 = vpop.f32.mrb[0].mxu0
      %v2103 = vadd.f32 %v1879, %v2102
      %v2104 = vpop.f32.mrb[0].mxu0
      %2105 = vdwg.mxu0
      %v2106 = vmax.f32 %v1948, 0.0
      %v2107 = vmax.f32 %v1953, 0.0
      %v2108 = vmax.f32 %v1958, 0.0
      %v2109 = vmax.f32 %v1963, 0.0
      %v2110 = vmax.f32 %v1968, 0.0
      %v2111 = vmax.f32 %v1973, 0.0
      %v2112 = vmax.f32 %v1978, 0.0
      %v2113 = vmax.f32 %v1983, 0.0
      %v2114 = vmax.f32 %v1988, 0.0
      %v2115 = vmax.f32 %v1993, 0.0
      %v2116 = vmax.f32 %v1998, 0.0
      %v2117 = vmax.f32 %v2003, 0.0
      %v2118 = vmax.f32 %v2008, 0.0
      %v2119 = vmax.f32 %v2013, 0.0
      %v2120 = vmax.f32 %v2018, 0.0
      %v2121 = vmax.f32 %v2023, 0.0
      %v2122 = vmax.f32 %v2028, 0.0
      %v2123 = vmax.f32 %v2033, 0.0
      %v2124 = vmax.f32 %v2038, 0.0
      %v2125 = vmax.f32 %v2043, 0.0
      %v2126 = vmax.f32 %v2048, 0.0
      %v2127 = vmax.f32 %v2053, 0.0
      %v2128 = vmax.f32 %v2058, 0.0
      %v2129 = vmax.f32 %v2063, 0.0
      %v2130 = vmax.f32 %v2068, 0.0
      %v2131 = vmax.f32 %v2073, 0.0
      %v2132 = vmax.f32 %v2078, 0.0
      %v2133 = vmax.f32 %v2083, 0.0
      %v2134 = vmax.f32 %v2088, 0.0
      %v2135 = vmax.f32 %v2093, 0.0
      %v2136 = vmax.f32 %v2098, 0.0
      %v2137 = vmax.f32 %v2103, 0.0
      %2138 = vst.msk [vmem:[%s238] sm:$0xff] %vm1561, %v2106
      %2139 = vst.msk [vmem:[%s238 + $0x8] sm:$0xff] %vm1561, %v2107
      %2140 = vst.msk [vmem:[%s238 + $0x10] sm:$0xff] %vm1561, %v2108
      %2141 = vst.msk [vmem:[%s238 + $0x18] sm:$0xff] %vm1561, %v2109
      %2142 = vst.msk [vmem:[%s238 + $0x20] sm:$0xff] %vm1561, %v2110
      %2143 = vst.msk [vmem:[%s238 + $0x28] sm:$0xff] %vm1561, %v2111
      %2144 = vst.msk [vmem:[%s238 + $0x30] sm:$0xff] %vm1561, %v2112
      %2145 = vst.msk [vmem:[%s238 + $0x38] sm:$0xff] %vm1561, %v2113
      %2146 = vst.msk [vmem:[%s238 + $0x40] sm:$0xff] %vm1561, %v2114
      %2147 = vst.msk [vmem:[%s238 + $0x48] sm:$0xff] %vm1561, %v2115
      %2148 = vst.msk [vmem:[%s238 + $0x50] sm:$0xff] %vm1561, %v2116
      %2149 = vst.msk [vmem:[%s238 + $0x58] sm:$0xff] %vm1561, %v2117
      %2150 = vst.msk [vmem:[%s238 + $0x60] sm:$0xff] %vm1561, %v2118
      %2151 = vst.msk [vmem:[%s238 + $0x68] sm:$0xff] %vm1561, %v2119
      %2152 = vst.msk [vmem:[%s238 + $0x70] sm:$0xff] %vm1561, %v2120
      %2153 = vst.msk [vmem:[%s238 + $0x78] sm:$0xff] %vm1561, %v2121
      %2154 = vst.msk [vmem:[%s238 + $0x80] sm:$0xff] %vm1561, %v2122
      %2155 = vst.msk [vmem:[%s238 + $0x88] sm:$0xff] %vm1561, %v2123
      %2156 = vst.msk [vmem:[%s238 + $0x90] sm:$0xff] %vm1561, %v2124
      %2157 = vst.msk [vmem:[%s238 + $0x98] sm:$0xff] %vm1561, %v2125
      %2158 = vst.msk [vmem:[%s238 + $0xa0] sm:$0xff] %vm1561, %v2126
      %2159 = vst.msk [vmem:[%s238 + $0xa8] sm:$0xff] %vm1561, %v2127
      %2160 = vst.msk [vmem:[%s238 + $0xb0] sm:$0xff] %vm1561, %v2128
      %2161 = vst.msk [vmem:[%s238 + $0xb8] sm:$0xff] %vm1561, %v2129
      %2162 = vst.msk [vmem:[%s238 + $0xc0] sm:$0xff] %vm1561, %v2130
      %2163 = vst.msk [vmem:[%s238 + $0xc8] sm:$0xff] %vm1561, %v2131
      %2164 = vst.msk [vmem:[%s238 + $0xd0] sm:$0xff] %vm1561, %v2132
      %2165 = vst.msk [vmem:[%s238 + $0xd8] sm:$0xff] %vm1561, %v2133
      %2166 = vst.msk [vmem:[%s238 + $0xe0] sm:$0xff] %vm1561, %v2134
      %2167 = vst.msk [vmem:[%s238 + $0xe8] sm:$0xff] %vm1561, %v2135
      %2168 = vst.msk [vmem:[%s238 + $0xf0] sm:$0xff] %vm1561, %v2136
      %2169 = vst.msk [vmem:[%s238 + $0xf8] sm:$0xff] %vm1561, %v2137
      %s2170 = smul.u32 32, %s21
      %p2171 = scmp.lt.s32.totalorder %s19, 1
      %s2172 = scalar_select %p2171, %s19, 1
      %p2173 = scmp.lt.s32.totalorder %s2170, 31
      %s2174 = scalar_select %p2173, %s2170, 31
      %p2175 = scmp.lt.s32.totalorder %s20, 0
      %s2176 = scalar_select %p2175, %s20, 0
      %s2177 = sadd.s32 %s2176, %s2174
      %s2178 = smul.addr %s2172, 32
      %s2179 = sadd.s32 %s2177, %s2178
      %s2180 = smul.addr %s2179, 8
      %s2181 = scalar_lea.vmem %s3, %s2180
      // Predicated region
      $region33: #{tpu_custom_call.1} parent=31 // pred_check
        %p2182 = pneg %p133
      $region34: #{tpu_custom_call.1} parent=31 // pred_check_branch
        %2184 = sbr.rel (%p2182) target = $region36
      $region35: #{tpu_custom_call.1} parent=31 // pred_region
        %s2185 = smul.u32 32, %s21
      $region36: #{tpu_custom_call.1} parent=31 // pred_fallthru
        _
    $region32: #{tpu_custom_call.1} parent=5 // pred_fallthru
      _
    %p2186 = scmp.le.s32.totalorder 2, %s9
    // Predicated region
    $region37: #{tpu_custom_call.1} parent=5 // pred_check
      %p2187 = pneg %p2186
    $region38: #{tpu_custom_call.1} parent=5 // pred_check_branch
      %2189 = sbr.rel (%p2187) target = $region40
    $region39: #{tpu_custom_call.1} parent=5 // pred_region
      %s2190 = ssub.s32 %s9, 2
      // Predicated region
      $region41: #{tpu_custom_call.1} parent=39 // pred_check
        %p2191 = pneg %p139
      $region42: #{tpu_custom_call.1} parent=39 // pred_check_branch
        %2193 = sbr.rel (%p2191) target = $region44
      $region43: #{tpu_custom_call.1} parent=39 // pred_region
        %s2194 = smul.u32 32, %s24
        %p2195 = scmp.lt.s32.totalorder %s22, 1
        %s2196 = scalar_select %p2195, %s22, 1
        %p2197 = scmp.lt.s32.totalorder %s2194, 31
        %s2198 = scalar_select %p2197, %s2194, 31
        %p2199 = scmp.lt.s32.totalorder %s23, 0
        %s2200 = scalar_select %p2199, %s23, 0
        %s2201 = sadd.s32 %s2200, %s2198
        %s2202 = smul.addr %s2196, 32
        %s2203 = sadd.s32 %s2201, %s2202
        %s2204 = smul.addr %s2203, 8
        %s2205 = scalar_lea.vmem %s3, %s2204
      $region44: #{tpu_custom_call.1} parent=39 // pred_fallthru
        _
    $region40: #{tpu_custom_call.1} parent=5 // pred_fallthru
      _
  $region6: #{tpu_custom_call.1} parent=0 // loop_footer
    %s13 = sadd.s32 1, %s9
  $region7: #{tpu_custom_call.1} parent=0 // loop_footer_branch
    %8 = sbr.rel target = $region3
  $region8: #{tpu_custom_call.1} parent=0 // loop_exit
    _

</llo_original>
